<compile_context>
chip_gen: v5e
topology: v5e:2x2
jax: 0.10.0
libtpu: 0.0.40
codegen_flags: <defaults>
</compile_context>

<pallas_src>
import jax
import jax.numpy as jnp
import numpy as np
from jax.experimental import pallas as pl
from jax.experimental.pallas import tpu as pltpu

DENSE_LEN = 4
SPARSE_LEN = 8
EMB_DIM = 25
EMB_OUT = 15
CAT_MAX = 15
KERNEL_SIZES = (2, 3, 5)

LANE = 128
_PREC = jax.lax.Precision.HIGHEST

OH_ROWS = SPARSE_LEN * CAT_MAX                                   # 120 stacked one-hot rows
_POOLED = tuple((SPARSE_LEN - k + 1) // 2 for k in KERNEL_SIZES)  # (3, 3, 2)
CONV_FEAT = EMB_OUT * sum(_POOLED)                               # 120
OUT_SIZE = DENSE_LEN + SPARSE_LEN + CONV_FEAT                    # 132


# ---------------------------------------------------------------------------
# Pallas kernel: one batch tile, batch on lanes.
# ---------------------------------------------------------------------------
def densesparse_kernel(idx_ref, sexp_ref, cpat_ref, w_ref, b_ref, out_ref):
    """idx_ref : (SPARSE_LEN, TILE_B) f32, integer-valued (= sparse.int() + 1)
    sexp_ref: (OH_ROWS, SPARSE_LEN) f32, sexp[r, s] = (r // CAT_MAX == s)
    cpat_ref: (OH_ROWS, 1) f32, cpat[r] = r % CAT_MAX
    w_ref   : (2*CONV_FEAT, OH_ROWS) folded embedding+conv weights
              (rows [0:CONV_FEAT] = even conv positions, rest = odd positions)
    b_ref   : (2*CONV_FEAT, 1) biases
    out_ref : (CONV_FEAT, TILE_B) pooled conv features, torch-Flatten row order
    """
    # Replicate each index row CAT_MAX times along sublanes (exact small-int matmul),
    # compare with the per-row category id -> stacked one-hot (OH_ROWS, TILE_B).
    idx_rep = jnp.dot(sexp_ref[...], idx_ref[...],
                      preferred_element_type=jnp.float32, precision=_PREC)
    onehot = (jnp.abs(idx_rep - cpat_ref[...]) < 0.5).astype(jnp.float32)

    # All conv branches / taps / output positions in a single MXU matmul.
    conv = jnp.dot(w_ref[...], onehot,
                   preferred_element_type=jnp.float32, precision=_PREC)
    conv = jnp.maximum(conv + b_ref[...], 0.0)                   # bias + ReLU (VPU)

    # MaxPool1d(2, 2): elementwise max of even-position half vs odd-position half.
    out_ref[...] = jnp.maximum(conv[0:CONV_FEAT, :], conv[CONV_FEAT:, :])


# ---------------------------------------------------------------------------
# Wrapper: parameter folding + lane-dense launch + passthrough concat.
# ---------------------------------------------------------------------------
def _round_up(x, m):
    return ((x + m - 1) // m) * m


def _fold_weights(emb_table, ws, bs):
    """Fold embedding table + Conv1d weights into one block-banded matrix.

    Row for (parity e, branch k, channel o, pooled pos t) computes conv_k[o, 2t+e]
    when applied to the stacked one-hot of a sample's sparse indices.
    """
    halves_w = []
    for parity in (0, 1):
        blocks = []
        for w, k in zip(ws, KERNEL_SIZES):
            l_out = SPARSE_LEN - k + 1
            p = l_out // 2
            # Per-tap folded weight: (EMB_OUT, CAT_MAX)
            wp = [jnp.dot(w[:, :, j], emb_table.T, precision=_PREC) for j in range(k)]
            blk = jnp.zeros((EMB_OUT * p, OH_ROWS), jnp.float32)
            for t in range(p):
                l = 2 * t + parity                       # conv output position
                for j in range(k):
                    c0 = (l + j) * CAT_MAX
                    blk = blk.at[t::p, c0:c0 + CAT_MAX].add(wp[j])
            blocks.append(blk)
        halves_w.append(jnp.concatenate(blocks, axis=0))
    b_half = jnp.concatenate(
        [jnp.repeat(b, (SPARSE_LEN - k + 1) // 2) for b, k in zip(bs, KERNEL_SIZES)])
    w_big = jnp.concatenate(halves_w, axis=0)                      # (2*CONV_FEAT, OH_ROWS)
    b_big = jnp.concatenate([b_half, b_half]).reshape(-1, 1)       # (2*CONV_FEAT, 1)
    return w_big.astype(jnp.float32), b_big.astype(jnp.float32)


def densesparse_forward(meta, emb_table, w2, b2, w3, b3, w5, b5):
    meta = meta.astype(jnp.float32)
    batch = meta.shape[0]
    dense = meta[:, SPARSE_LEN:]                                   # (B, DENSE_LEN)
    idx = meta[:, :SPARSE_LEN].astype(jnp.int32) + 1               # sparse.int() + 1
    # NOTE: nn.Embedding would raise for idx outside [0, CAT_MAX); the one-hot
    # formulation silently yields a zero embedding instead.
    idx_f = idx.astype(jnp.float32)

    w_big, b_big = _fold_weights(emb_table.astype(jnp.float32),
                                 (w2, w3, w5), (b2, b3, b5))
    sexp = jnp.asarray(np.repeat(np.eye(SPARSE_LEN, dtype=np.float32), CAT_MAX, axis=0))
    cpat = jnp.asarray(np.tile(np.arange(CAT_MAX, dtype=np.float32),
                               SPARSE_LEN).reshape(OH_ROWS, 1))

    tile_b = min(512, _round_up(batch, LANE))
    b_pad = _round_up(batch, tile_b)
    idx_t = jnp.zeros((SPARSE_LEN, b_pad), jnp.float32).at[:, :batch].set(idx_f.T)

    conv_t = pl.pallas_call(
        densesparse_kernel,
        out_shape=jax.ShapeDtypeStruct((CONV_FEAT, b_pad), jnp.float32),
        grid=(b_pad // tile_b,),
        in_specs=[
            pl.BlockSpec((SPARSE_LEN, tile_b), lambda i: (0, i)),
            pl.BlockSpec((OH_ROWS, SPARSE_LEN), lambda i: (0, 0)),
            pl.BlockSpec((OH_ROWS, 1), lambda i: (0, 0)),
            pl.BlockSpec((2 * CONV_FEAT, OH_ROWS), lambda i: (0, 0)),
            pl.BlockSpec((2 * CONV_FEAT, 1), lambda i: (0, 0)),
        ],
        out_specs=pl.BlockSpec((CONV_FEAT, tile_b), lambda i: (0, i)),
        compiler_params=pltpu.CompilerParams(dimension_semantics=("parallel",)),
    )(idx_t, sexp, cpat, w_big, b_big)

    conv = conv_t[:, :batch].T                                     # (B, CONV_FEAT)
    # output = [dense_meta, sparse_idx, conv2, conv3, conv5]
    return jnp.concatenate([dense, idx_f, conv], axis=1)


# ---------------------------------------------------------------------------
# Pure-JAX reference (mirrors the PyTorch forward)
# ---------------------------------------------------------------------------
def reference(meta, emb_table, w2, b2, w3, b3, w5, b5):
    dense = meta[:, SPARSE_LEN:]
    idx = meta[:, :SPARSE_LEN].astype(jnp.int32) + 1
    emb = emb_table[idx]                              # (B, S, E)
    x = jnp.transpose(emb, (0, 2, 1))                 # (B, E, S)  (NCL like torch)

    def branch(w, bb, k):
        l_out = SPARSE_LEN - k + 1
        out = jnp.zeros((meta.shape[0], EMB_OUT, l_out), jnp.float32)
        for j in range(k):
            out = out + jnp.einsum('oc,bcl->bol', w[:, :, j], x[:, :, j:j + l_out],
                                   precision=_PREC)
        out = jax.nn.relu(out + bb[None, :, None])
        p = l_out // 2
        pooled = jnp.maximum(out[:, :, 0:2 * p:2], out[:, :, 1:2 * p:2])
        return pooled.reshape(meta.shape[0], EMB_OUT * p)

    c2 = branch(w2, b2, 2)
    c3 = branch(w3, b3, 3)
    c5 = branch(w5, b5, 5)
    return jnp.concatenate([dense, idx.astype(jnp.float32), c2, c3, c5], axis=1)


# ---------------------------------------------------------------------------
if __name__ == "__main__":
    key = jax.random.PRNGKey(0)
    ks = jax.random.split(key, 9)
    B = 2

    sparse_cols = jax.random.randint(ks[0], (B, SPARSE_LEN), 0, CAT_MAX - 1
                                     ).astype(jnp.float32)
    dense_cols = jax.random.normal(ks[1], (B, DENSE_LEN), jnp.float32)
    meta = jnp.concatenate([sparse_cols, dense_cols], axis=1)       # (B, S + D)

    emb_table = 0.1 * jax.random.normal(ks[2], (CAT_MAX, EMB_DIM), jnp.float32)
    w2 = 0.1 * jax.random.normal(ks[3], (EMB_OUT, EMB_DIM, 2), jnp.float32)
    b2 = 0.1 * jax.random.normal(ks[4], (EMB_OUT,), jnp.float32)
    w3 = 0.1 * jax.random.normal(ks[5], (EMB_OUT, EMB_DIM, 3), jnp.float32)
    b3 = 0.1 * jax.random.normal(ks[6], (EMB_OUT,), jnp.float32)
    w5 = 0.1 * jax.random.normal(ks[7], (EMB_OUT, EMB_DIM, 5), jnp.float32)
    b5 = 0.1 * jax.random.normal(ks[8], (EMB_OUT,), jnp.float32)

    out = densesparse_forward(meta, emb_table, w2, b2, w3, b3, w5, b5)
    out = jax.block_until_ready(out)

    ref = reference(meta, emb_table, w2, b2, w3, b3, w5, b5)
    ref = jax.block_until_ready(ref)

    assert out.shape == (B, OUT_SIZE), (out.shape, OUT_SIZE)
    np.testing.assert_allclose(np.asarray(out), np.asarray(ref), rtol=1e-3, atol=1e-3)
    print("KERNEL_OK")
</pallas_src>

<mosaic_0001>
module attributes {stable_mosaic.version = 11 : i64} {
  func.func @densesparse_kernel(%arg0: i32, %arg1: memref<8x128xf32, #tpu.memory_space<vmem>>, %arg2: memref<120x8xf32, #tpu.memory_space<vmem>>, %arg3: memref<120x1xf32, #tpu.memory_space<vmem>>, %arg4: memref<240x120xf32, #tpu.memory_space<vmem>>, %arg5: memref<240x1xf32, #tpu.memory_space<vmem>>, %arg6: memref<120x128xf32, #tpu.memory_space<vmem>>) attributes {dimension_semantics = [#tpu.dimension_semantics<parallel>], iteration_bounds = array<i64: 1>, scalar_prefetch = 0 : i64, scratch_operands = 0 : i64, tpu.core_type = #tpu.core_type<tc>, window_params = [{transform_indices = @transform_0, window_bounds = array<i64: 8, 128>}, {pipeline_mode = #tpu.pipeline_mode<synchronous>, transform_indices = @transform_1, window_bounds = array<i64: 120, 8>}, {pipeline_mode = #tpu.pipeline_mode<synchronous>, transform_indices = @transform_2, window_bounds = array<i64: 120, 1>}, {pipeline_mode = #tpu.pipeline_mode<synchronous>, transform_indices = @transform_3, window_bounds = array<i64: 240, 120>}, {pipeline_mode = #tpu.pipeline_mode<synchronous>, transform_indices = @transform_4, window_bounds = array<i64: 240, 1>}, {transform_indices = @transform_5, window_bounds = array<i64: 120, 128>}]} {
    %c0 = arith.constant 0 : index
    %c0_0 = arith.constant 0 : index
    %0 = vector.load %arg2[%c0, %c0_0] : memref<120x8xf32, #tpu.memory_space<vmem>>, vector<120x8xf32>
    %c0_1 = arith.constant 0 : index
    %c0_2 = arith.constant 0 : index
    %1 = vector.load %arg1[%c0_1, %c0_2] : memref<8x128xf32, #tpu.memory_space<vmem>>, vector<8x128xf32>
    %cst = arith.constant dense<0.000000e+00> : vector<120x128xf32>
    %2 = tpu.matmul %0, %1, %cst {dimension_numbers = #tpu.dot_dimension_numbers<[1], [0], [0], [1], [0, 0, 1, 1], [], []>, precision = #tpu.contract_precision<fp32>} : vector<120x8xf32>, vector<8x128xf32>, vector<120x128xf32> -> vector<120x128xf32>
    %c0_3 = arith.constant 0 : index
    %c0_4 = arith.constant 0 : index
    %3 = vector.load %arg3[%c0_3, %c0_4] : memref<120x1xf32, #tpu.memory_space<vmem>>, vector<120x1xf32>
    %4 = vector.broadcast %3 : vector<120x1xf32> to vector<120x128xf32>
    %5 = arith.subf %2, %4 : vector<120x128xf32>
    %6 = math.absf %5 : vector<120x128xf32>
    %cst_5 = arith.constant 5.000000e-01 : f32
    %7 = vector.broadcast %cst_5 : f32 to vector<120x128xf32>
    %8 = arith.cmpf olt, %6, %7 : vector<120x128xf32>
    %9 = arith.extui %8 : vector<120x128xi1> to vector<120x128xi32>
    %10 = arith.sitofp %9 : vector<120x128xi32> to vector<120x128xf32>
    %c0_6 = arith.constant 0 : index
    %c0_7 = arith.constant 0 : index
    %11 = vector.load %arg4[%c0_6, %c0_7] : memref<240x120xf32, #tpu.memory_space<vmem>>, vector<240x120xf32>
    %cst_8 = arith.constant dense<0.000000e+00> : vector<240x128xf32>
    %12 = tpu.matmul %11, %10, %cst_8 {dimension_numbers = #tpu.dot_dimension_numbers<[1], [0], [0], [1], [0, 0, 1, 1], [], []>, precision = #tpu.contract_precision<fp32>} : vector<240x120xf32>, vector<120x128xf32>, vector<240x128xf32> -> vector<240x128xf32>
    %c0_9 = arith.constant 0 : index
    %c0_10 = arith.constant 0 : index
    %13 = vector.load %arg5[%c0_9, %c0_10] : memref<240x1xf32, #tpu.memory_space<vmem>>, vector<240x1xf32>
    %14 = vector.broadcast %13 : vector<240x1xf32> to vector<240x128xf32>
    %15 = arith.addf %12, %14 : vector<240x128xf32>
    %cst_11 = arith.constant 0.000000e+00 : f32
    %16 = vector.broadcast %cst_11 : f32 to vector<240x128xf32>
    %17 = arith.maximumf %15, %16 : vector<240x128xf32>
    %18 = vector.extract_strided_slice %17 {offsets = [0, 0], sizes = [120, 128], strides = [1, 1]} : vector<240x128xf32> to vector<120x128xf32>
    %19 = vector.extract_strided_slice %17 {offsets = [120, 0], sizes = [120, 128], strides = [1, 1]} : vector<240x128xf32> to vector<120x128xf32>
    %20 = arith.maximumf %18, %19 : vector<120x128xf32>
    %c0_12 = arith.constant 0 : index
    %c0_13 = arith.constant 0 : index
    %21 = vector.load %arg6[%c0_12, %c0_13] : memref<120x128xf32, #tpu.memory_space<vmem>>, vector<120x128xf32>
    tpu.vector_store %arg6[%c0_12, %c0_13], %20 {strides = array<i32>} : memref<120x128xf32, #tpu.memory_space<vmem>>, vector<120x128xf32>,
    return
  }
  func.func @transform_0(%arg0: i32) -> (i32, i32) {
    %c0_i32 = arith.constant 0 : i32
    %c0_i32_0 = arith.constant 0 : i32
    return %c0_i32, %arg0 : i32, i32
  }
  func.func @transform_1(%arg0: i32) -> (i32, i32) {
    %c0_i32 = arith.constant 0 : i32
    %c0_i32_0 = arith.constant 0 : i32
    %c0_i32_1 = arith.constant 0 : i32
    return %c0_i32, %c0_i32_0 : i32, i32
  }
  func.func @transform_2(%arg0: i32) -> (i32, i32) {
    %c0_i32 = arith.constant 0 : i32
    %c0_i32_0 = arith.constant 0 : i32
    %c0_i32_1 = arith.constant 0 : i32
    return %c0_i32, %c0_i32_0 : i32, i32
  }
  func.func @transform_3(%arg0: i32) -> (i32, i32) {
    %c0_i32 = arith.constant 0 : i32
    %c0_i32_0 = arith.constant 0 : i32
    %c0_i32_1 = arith.constant 0 : i32
    return %c0_i32, %c0_i32_0 : i32, i32
  }
  func.func @transform_4(%arg0: i32) -> (i32, i32) {
    %c0_i32 = arith.constant 0 : i32
    %c0_i32_0 = arith.constant 0 : i32
    %c0_i32_1 = arith.constant 0 : i32
    return %c0_i32, %c0_i32_0 : i32, i32
  }
  func.func @transform_5(%arg0: i32) -> (i32, i32) {
    %c0_i32 = arith.constant 0 : i32
    %c0_i32_0 = arith.constant 0 : i32
    return %c0_i32, %arg0 : i32, i32
  }
}

</mosaic_0001>

<llo_original>
// kernel: tpu_custom_call.1
$region0: #{tpu_custom_call.1}
  #allocation0 [shape = 'u32[]', space=smem, size = 0x4, offset = 0x4, fixed_abs, tag = 'smem constant byte address 0x4 - core index']
  #allocation1 [shape = 'u32[72,128]{1,0:T(1,128)}', space=vmem, size = 0x9000, scoped, tag = 'internal scratch']
  %s0 = inlined_call_operand.vmem [shape: f32[8,128], index: 0, kind: input, shape index: {}]
  %s1 = inlined_call_operand.vmem [shape: f32[120,8], index: 1, kind: input, shape index: {}]
  %s2 = inlined_call_operand.vmem [shape: f32[120,1], index: 2, kind: input, shape index: {}]
  %s3 = inlined_call_operand.vmem [shape: f32[240,120], index: 3, kind: input, shape index: {}]
  %s4 = inlined_call_operand.vmem [shape: f32[240,1], index: 4, kind: input, shape index: {}]
  %s5 = inlined_call_operand.hbm [shape: f32[120,128], index: 5, kind: output, shape index: {}]
  %s6 = sld [smem:[#allocation0]]
  $region30: #{tpu_custom_call.1} parent=0
    _
  %s8 = ssub.s32 1, %s6
  %s9 = scalar_select 0, %s8, %s6
  $region1: #{tpu_custom_call.1} parent=0
    #allocation2 [shape = 'u8[61440]{0}', space=vmem, size = 0xf000, scoped, tag = 'output window, operand 0, single buffered']
    #allocation3 [shape = 's32[1]{0}', space=sflag, size = 0x4, scoped, tag = 'scoped memory for tpu_custom_call.1']
    %10 = vsyncpa [#allocation3], 0
    // Predicated region
    $region2: #{tpu_custom_call.1} parent=1 // pred_check
      _
    $region3: #{tpu_custom_call.1} parent=1 // pred_check_branch
      %12 = sbr.rel (0) target = $region5
    $region4: #{tpu_custom_call.1} parent=1 // pred_region
      _
    $region5: #{tpu_custom_call.1} parent=1 // pred_fallthru
      _
    // Predicated region
    $region6: #{tpu_custom_call.1} parent=1 // pred_check
      _
    $region7: #{tpu_custom_call.1} parent=1 // pred_check_branch
      %14 = sbr.rel (0) target = $region9
    $region8: #{tpu_custom_call.1} parent=1 // pred_region
      _
    $region9: #{tpu_custom_call.1} parent=1 // pred_fallthru
      _
    // Predicated region
    $region10: #{tpu_custom_call.1} parent=1 // pred_check
      _
    $region11: #{tpu_custom_call.1} parent=1 // pred_check_branch
      %16 = sbr.rel (0) target = $region13
    $region12: #{tpu_custom_call.1} parent=1 // pred_region
      _
    $region13: #{tpu_custom_call.1} parent=1 // pred_fallthru
      _
    // Predicated region
    $region14: #{tpu_custom_call.1} parent=1 // pred_check
      _
    $region15: #{tpu_custom_call.1} parent=1 // pred_check_branch
      %18 = sbr.rel (0) target = $region17
    $region16: #{tpu_custom_call.1} parent=1 // pred_region
      _
    $region17: #{tpu_custom_call.1} parent=1 // pred_fallthru
      _
    // Predicated region
    $region18: #{tpu_custom_call.1} parent=1 // pred_check
      _
    $region19: #{tpu_custom_call.1} parent=1 // pred_check_branch
      %20 = sbr.rel (0) target = $region21
    $region20: #{tpu_custom_call.1} parent=1 // pred_region
      _
    $region21: #{tpu_custom_call.1} parent=1 // pred_fallthru
      _
    %v21 = vld [vmem:[%s1] sm:$0xff]
    %v22 = vld [vmem:[%s1 + $0x8] sm:$0xff]
    %v23 = vld [vmem:[%s1 + $0x10] sm:$0xff]
    %v24 = vld [vmem:[%s1 + $0x18] sm:$0xff]
    %v25 = vld [vmem:[%s1 + $0x20] sm:$0xff]
    %v26 = vld [vmem:[%s1 + $0x28] sm:$0xff]
    %v27 = vld [vmem:[%s1 + $0x30] sm:$0xff]
    %v28 = vld [vmem:[%s1 + $0x38] sm:$0xff]
    %v29 = vld [vmem:[%s1 + $0x40] sm:$0xff]
    %v30 = vld [vmem:[%s1 + $0x48] sm:$0xff]
    %v31 = vld [vmem:[%s1 + $0x50] sm:$0xff]
    %v32 = vld [vmem:[%s1 + $0x58] sm:$0xff]
    %v33 = vld [vmem:[%s1 + $0x60] sm:$0xff]
    %v34 = vld [vmem:[%s1 + $0x68] sm:$0xff]
    %v35 = vld [vmem:[%s1 + $0x70] sm:$0xff]
    %v36 = vld [vmem:[%s0] sm:$0xff]
    %vm37 = vcmask 64512
    %v39 = vsel %vm37, %v21, 0
    %v42 = vsel %vm37, %v22, 0
    %v45 = vsel %vm37, %v23, 0
    %v48 = vsel %vm37, %v24, 0
    %v51 = vsel %vm37, %v25, 0
    %v54 = vsel %vm37, %v26, 0
    %v57 = vsel %vm37, %v27, 0
    %v60 = vsel %vm37, %v28, 0
    %v63 = vsel %vm37, %v29, 0
    %v66 = vsel %vm37, %v30, 0
    %v69 = vsel %vm37, %v31, 0
    %v72 = vsel %vm37, %v32, 0
    %v75 = vsel %vm37, %v33, 0
    %v78 = vsel %vm37, %v34, 0
    %v81 = vsel %vm37, %v35, 0
    %83 = vmatpush.msra.mxu0 0.0
    %84 = vmatpush.msra.mxu0 0.0
    %85 = vmatpush.msra.mxu0 0.0
    %86 = vmatpush.msra.mxu0 0.0
    %87 = vmatpush.msra.mxu0 0.0
    %88 = vmatpush.msra.mxu0 0.0
    %89 = vmatpush.msra.mxu0 0.0
    %90 = vmatpush.msra.mxu0 0.0
    %91 = vmatpush.msra.mxu0 0.0
    %92 = vmatpush.msra.mxu0 0.0
    %93 = vmatpush.msra.mxu0 0.0
    %94 = vmatpush.msra.mxu0 0.0
    %95 = vmatpush.msra.mxu0 0.0
    %96 = vmatpush.msra.mxu0 0.0
    %97 = vmatpush.msra.mxu0 0.0
    %v98 = vand.u32 %v36, 4294901760
    %99 = vmatpush.msra.mxu0 %v98
    %v100 = vand.u32 %v39, 4294901760
    %v101 = vsub.f32 %v39, %v100
    %v102 = vand.u32 %v101, 4294901760
    %v103 = vsub.f32 %v101, %v102
    %v104 = vand.u32 %v103, 4294901760
    %105 = vmatmul.f32.gmra.mxu0 %v104
    %v106 = vpop.f32.mrf.mxu0
    %v107 = vadd.f32 0.0, %v106
    %v108 = vand.u32 %v42, 4294901760
    %v109 = vsub.f32 %v42, %v108
    %v110 = vand.u32 %v109, 4294901760
    %v111 = vsub.f32 %v109, %v110
    %v112 = vand.u32 %v111, 4294901760
    %113 = vmatmul.f32.gmra.mxu0 %v112
    %v114 = vpop.f32.mrf.mxu0
    %v115 = vadd.f32 0.0, %v114
    %v116 = vand.u32 %v45, 4294901760
    %v117 = vsub.f32 %v45, %v116
    %v118 = vand.u32 %v117, 4294901760
    %v119 = vsub.f32 %v117, %v118
    %v120 = vand.u32 %v119, 4294901760
    %121 = vmatmul.f32.gmra.mxu0 %v120
    %v122 = vpop.f32.mrf.mxu0
    %v123 = vadd.f32 0.0, %v122
    %v124 = vand.u32 %v48, 4294901760
    %v125 = vsub.f32 %v48, %v124
    %v126 = vand.u32 %v125, 4294901760
    %v127 = vsub.f32 %v125, %v126
    %v128 = vand.u32 %v127, 4294901760
    %129 = vmatmul.f32.gmra.mxu0 %v128
    %v130 = vpop.f32.mrf.mxu0
    %v131 = vadd.f32 0.0, %v130
    %v132 = vand.u32 %v51, 4294901760
    %v133 = vsub.f32 %v51, %v132
    %v134 = vand.u32 %v133, 4294901760
    %v135 = vsub.f32 %v133, %v134
    %v136 = vand.u32 %v135, 4294901760
    %137 = vmatmul.f32.gmra.mxu0 %v136
    %v138 = vpop.f32.mrf.mxu0
    %v139 = vadd.f32 0.0, %v138
    %v140 = vand.u32 %v54, 4294901760
    %v141 = vsub.f32 %v54, %v140
    %v142 = vand.u32 %v141, 4294901760
    %v143 = vsub.f32 %v141, %v142
    %v144 = vand.u32 %v143, 4294901760
    %145 = vmatmul.f32.gmra.mxu0 %v144
    %v146 = vpop.f32.mrf.mxu0
    %v147 = vadd.f32 0.0, %v146
    %v148 = vand.u32 %v57, 4294901760
    %v149 = vsub.f32 %v57, %v148
    %v150 = vand.u32 %v149, 4294901760
    %v151 = vsub.f32 %v149, %v150
    %v152 = vand.u32 %v151, 4294901760
    %153 = vmatmul.f32.gmra.mxu0 %v152
    %v154 = vpop.f32.mrf.mxu0
    %v155 = vadd.f32 0.0, %v154
    %v156 = vand.u32 %v60, 4294901760
    %v157 = vsub.f32 %v60, %v156
    %v158 = vand.u32 %v157, 4294901760
    %v159 = vsub.f32 %v157, %v158
    %v160 = vand.u32 %v159, 4294901760
    %161 = vmatmul.f32.gmra.mxu0 %v160
    %v162 = vpop.f32.mrf.mxu0
    %v163 = vadd.f32 0.0, %v162
    %v164 = vand.u32 %v63, 4294901760
    %v165 = vsub.f32 %v63, %v164
    %v166 = vand.u32 %v165, 4294901760
    %v167 = vsub.f32 %v165, %v166
    %v168 = vand.u32 %v167, 4294901760
    %169 = vmatmul.f32.gmra.mxu0 %v168
    %v170 = vpop.f32.mrf.mxu0
    %v171 = vadd.f32 0.0, %v170
    %v172 = vand.u32 %v66, 4294901760
    %v173 = vsub.f32 %v66, %v172
    %v174 = vand.u32 %v173, 4294901760
    %v175 = vsub.f32 %v173, %v174
    %v176 = vand.u32 %v175, 4294901760
    %177 = vmatmul.f32.gmra.mxu0 %v176
    %v178 = vpop.f32.mrf.mxu0
    %v179 = vadd.f32 0.0, %v178
    %v180 = vand.u32 %v69, 4294901760
    %v181 = vsub.f32 %v69, %v180
    %v182 = vand.u32 %v181, 4294901760
    %v183 = vsub.f32 %v181, %v182
    %v184 = vand.u32 %v183, 4294901760
    %185 = vmatmul.f32.gmra.mxu0 %v184
    %v186 = vpop.f32.mrf.mxu0
    %v187 = vadd.f32 0.0, %v186
    %v188 = vand.u32 %v72, 4294901760
    %v189 = vsub.f32 %v72, %v188
    %v190 = vand.u32 %v189, 4294901760
    %v191 = vsub.f32 %v189, %v190
    %v192 = vand.u32 %v191, 4294901760
    %193 = vmatmul.f32.gmra.mxu0 %v192
    %v194 = vpop.f32.mrf.mxu0
    %v195 = vadd.f32 0.0, %v194
    %v196 = vand.u32 %v75, 4294901760
    %v197 = vsub.f32 %v75, %v196
    %v198 = vand.u32 %v197, 4294901760
    %v199 = vsub.f32 %v197, %v198
    %v200 = vand.u32 %v199, 4294901760
    %201 = vmatmul.f32.gmra.mxu0 %v200
    %v202 = vpop.f32.mrf.mxu0
    %v203 = vadd.f32 0.0, %v202
    %v204 = vand.u32 %v78, 4294901760
    %v205 = vsub.f32 %v78, %v204
    %v206 = vand.u32 %v205, 4294901760
    %v207 = vsub.f32 %v205, %v206
    %v208 = vand.u32 %v207, 4294901760
    %209 = vmatmul.f32.gmra.mxu0 %v208
    %v210 = vpop.f32.mrf.mxu0
    %v211 = vadd.f32 0.0, %v210
    %v212 = vand.u32 %v81, 4294901760
    %v213 = vsub.f32 %v81, %v212
    %v214 = vand.u32 %v213, 4294901760
    %v215 = vsub.f32 %v213, %v214
    %v216 = vand.u32 %v215, 4294901760
    %217 = vmatmul.f32.gmra.mxu0 %v216
    %v218 = vpop.f32.mrf.mxu0
    %v219 = vadd.f32 0.0, %v218
    %220 = vdwg.mxu0
    %221 = vmatpush.msra.mxu0 0.0
    %222 = vmatpush.msra.mxu0 0.0
    %223 = vmatpush.msra.mxu0 0.0
    %224 = vmatpush.msra.mxu0 0.0
    %225 = vmatpush.msra.mxu0 0.0
    %226 = vmatpush.msra.mxu0 0.0
    %227 = vmatpush.msra.mxu0 0.0
    %228 = vmatpush.msra.mxu0 0.0
    %229 = vmatpush.msra.mxu0 0.0
    %230 = vmatpush.msra.mxu0 0.0
    %231 = vmatpush.msra.mxu0 0.0
    %232 = vmatpush.msra.mxu0 0.0
    %233 = vmatpush.msra.mxu0 0.0
    %234 = vmatpush.msra.mxu0 0.0
    %235 = vmatpush.msra.mxu0 0.0
    %v236 = vand.u32 %v36, 4294901760
    %v237 = vsub.f32 %v36, %v236
    %v238 = vand.u32 %v237, 4294901760
    %v239 = vsub.f32 %v237, %v238
    %v240 = vand.u32 %v239, 4294901760
    %241 = vmatpush.msra.mxu0 %v240
    %v242 = vand.u32 %v39, 4294901760
    %243 = vmatmul.f32.gmra.mxu0 %v242
    %v244 = vpop.f32.mrf.mxu0
    %v245 = vadd.f32 %v107, %v244
    %v246 = vand.u32 %v42, 4294901760
    %247 = vmatmul.f32.gmra.mxu0 %v246
    %v248 = vpop.f32.mrf.mxu0
    %v249 = vadd.f32 %v115, %v248
    %v250 = vand.u32 %v45, 4294901760
    %251 = vmatmul.f32.gmra.mxu0 %v250
    %v252 = vpop.f32.mrf.mxu0
    %v253 = vadd.f32 %v123, %v252
    %v254 = vand.u32 %v48, 4294901760
    %255 = vmatmul.f32.gmra.mxu0 %v254
    %v256 = vpop.f32.mrf.mxu0
    %v257 = vadd.f32 %v131, %v256
    %v258 = vand.u32 %v51, 4294901760
    %259 = vmatmul.f32.gmra.mxu0 %v258
    %v260 = vpop.f32.mrf.mxu0
    %v261 = vadd.f32 %v139, %v260
    %v262 = vand.u32 %v54, 4294901760
    %263 = vmatmul.f32.gmra.mxu0 %v262
    %v264 = vpop.f32.mrf.mxu0
    %v265 = vadd.f32 %v147, %v264
    %v266 = vand.u32 %v57, 4294901760
    %267 = vmatmul.f32.gmra.mxu0 %v266
    %v268 = vpop.f32.mrf.mxu0
    %v269 = vadd.f32 %v155, %v268
    %v270 = vand.u32 %v60, 4294901760
    %271 = vmatmul.f32.gmra.mxu0 %v270
    %v272 = vpop.f32.mrf.mxu0
    %v273 = vadd.f32 %v163, %v272
    %v274 = vand.u32 %v63, 4294901760
    %275 = vmatmul.f32.gmra.mxu0 %v274
    %v276 = vpop.f32.mrf.mxu0
    %v277 = vadd.f32 %v171, %v276
    %v278 = vand.u32 %v66, 4294901760
    %279 = vmatmul.f32.gmra.mxu0 %v278
    %v280 = vpop.f32.mrf.mxu0
    %v281 = vadd.f32 %v179, %v280
    %v282 = vand.u32 %v69, 4294901760
    %283 = vmatmul.f32.gmra.mxu0 %v282
    %v284 = vpop.f32.mrf.mxu0
    %v285 = vadd.f32 %v187, %v284
    %v286 = vand.u32 %v72, 4294901760
    %287 = vmatmul.f32.gmra.mxu0 %v286
    %v288 = vpop.f32.mrf.mxu0
    %v289 = vadd.f32 %v195, %v288
    %v290 = vand.u32 %v75, 4294901760
    %291 = vmatmul.f32.gmra.mxu0 %v290
    %v292 = vpop.f32.mrf.mxu0
    %v293 = vadd.f32 %v203, %v292
    %v294 = vand.u32 %v78, 4294901760
    %295 = vmatmul.f32.gmra.mxu0 %v294
    %v296 = vpop.f32.mrf.mxu0
    %v297 = vadd.f32 %v211, %v296
    %v298 = vand.u32 %v81, 4294901760
    %299 = vmatmul.f32.gmra.mxu0 %v298
    %v300 = vpop.f32.mrf.mxu0
    %v301 = vadd.f32 %v219, %v300
    %302 = vdwg.mxu0
    %303 = vmatpush.msra.mxu0 0.0
    %304 = vmatpush.msra.mxu0 0.0
    %305 = vmatpush.msra.mxu0 0.0
    %306 = vmatpush.msra.mxu0 0.0
    %307 = vmatpush.msra.mxu0 0.0
    %308 = vmatpush.msra.mxu0 0.0
    %309 = vmatpush.msra.mxu0 0.0
    %310 = vmatpush.msra.mxu0 0.0
    %311 = vmatpush.msra.mxu0 0.0
    %312 = vmatpush.msra.mxu0 0.0
    %313 = vmatpush.msra.mxu0 0.0
    %314 = vmatpush.msra.mxu0 0.0
    %315 = vmatpush.msra.mxu0 0.0
    %316 = vmatpush.msra.mxu0 0.0
    %317 = vmatpush.msra.mxu0 0.0
    %v318 = vand.u32 %v36, 4294901760
    %v319 = vsub.f32 %v36, %v318
    %320 = vmatpush.msra.mxu0 %v319
    %v321 = vand.u32 %v39, 4294901760
    %v322 = vsub.f32 %v39, %v321
    %323 = vmatmul.f32.gmra.mxu0 %v322
    %v324 = vpop.f32.mrf.mxu0
    %v325 = vadd.f32 %v245, %v324
    %v326 = vand.u32 %v42, 4294901760
    %v327 = vsub.f32 %v42, %v326
    %328 = vmatmul.f32.gmra.mxu0 %v327
    %v329 = vpop.f32.mrf.mxu0
    %v330 = vadd.f32 %v249, %v329
    %v331 = vand.u32 %v45, 4294901760
    %v332 = vsub.f32 %v45, %v331
    %333 = vmatmul.f32.gmra.mxu0 %v332
    %v334 = vpop.f32.mrf.mxu0
    %v335 = vadd.f32 %v253, %v334
    %v336 = vand.u32 %v48, 4294901760
    %v337 = vsub.f32 %v48, %v336
    %338 = vmatmul.f32.gmra.mxu0 %v337
    %v339 = vpop.f32.mrf.mxu0
    %v340 = vadd.f32 %v257, %v339
    %v341 = vand.u32 %v51, 4294901760
    %v342 = vsub.f32 %v51, %v341
    %343 = vmatmul.f32.gmra.mxu0 %v342
    %v344 = vpop.f32.mrf.mxu0
    %v345 = vadd.f32 %v261, %v344
    %v346 = vand.u32 %v54, 4294901760
    %v347 = vsub.f32 %v54, %v346
    %348 = vmatmul.f32.gmra.mxu0 %v347
    %v349 = vpop.f32.mrf.mxu0
    %v350 = vadd.f32 %v265, %v349
    %v351 = vand.u32 %v57, 4294901760
    %v352 = vsub.f32 %v57, %v351
    %353 = vmatmul.f32.gmra.mxu0 %v352
    %v354 = vpop.f32.mrf.mxu0
    %v355 = vadd.f32 %v269, %v354
    %v356 = vand.u32 %v60, 4294901760
    %v357 = vsub.f32 %v60, %v356
    %358 = vmatmul.f32.gmra.mxu0 %v357
    %v359 = vpop.f32.mrf.mxu0
    %v360 = vadd.f32 %v273, %v359
    %v361 = vand.u32 %v63, 4294901760
    %v362 = vsub.f32 %v63, %v361
    %363 = vmatmul.f32.gmra.mxu0 %v362
    %v364 = vpop.f32.mrf.mxu0
    %v365 = vadd.f32 %v277, %v364
    %v366 = vand.u32 %v66, 4294901760
    %v367 = vsub.f32 %v66, %v366
    %368 = vmatmul.f32.gmra.mxu0 %v367
    %v369 = vpop.f32.mrf.mxu0
    %v370 = vadd.f32 %v281, %v369
    %v371 = vand.u32 %v69, 4294901760
    %v372 = vsub.f32 %v69, %v371
    %373 = vmatmul.f32.gmra.mxu0 %v372
    %v374 = vpop.f32.mrf.mxu0
    %v375 = vadd.f32 %v285, %v374
    %v376 = vand.u32 %v72, 4294901760
    %v377 = vsub.f32 %v72, %v376
    %378 = vmatmul.f32.gmra.mxu0 %v377
    %v379 = vpop.f32.mrf.mxu0
    %v380 = vadd.f32 %v289, %v379
    %v381 = vand.u32 %v75, 4294901760
    %v382 = vsub.f32 %v75, %v381
    %383 = vmatmul.f32.gmra.mxu0 %v382
    %v384 = vpop.f32.mrf.mxu0
    %v385 = vadd.f32 %v293, %v384
    %v386 = vand.u32 %v78, 4294901760
    %v387 = vsub.f32 %v78, %v386
    %388 = vmatmul.f32.gmra.mxu0 %v387
    %v389 = vpop.f32.mrf.mxu0
    %v390 = vadd.f32 %v297, %v389
    %v391 = vand.u32 %v81, 4294901760
    %v392 = vsub.f32 %v81, %v391
    %393 = vmatmul.f32.gmra.mxu0 %v392
    %v394 = vpop.f32.mrf.mxu0
    %v395 = vadd.f32 %v301, %v394
    %396 = vdwg.mxu0
    %397 = vmatpush.msra.mxu0 0.0
    %398 = vmatpush.msra.mxu0 0.0
    %399 = vmatpush.msra.mxu0 0.0
    %400 = vmatpush.msra.mxu0 0.0
    %401 = vmatpush.msra.mxu0 0.0
    %402 = vmatpush.msra.mxu0 0.0
    %403 = vmatpush.msra.mxu0 0.0
    %404 = vmatpush.msra.mxu0 0.0
    %405 = vmatpush.msra.mxu0 0.0
    %406 = vmatpush.msra.mxu0 0.0
    %407 = vmatpush.msra.mxu0 0.0
    %408 = vmatpush.msra.mxu0 0.0
    %409 = vmatpush.msra.mxu0 0.0
    %410 = vmatpush.msra.mxu0 0.0
    %411 = vmatpush.msra.mxu0 0.0
    %v412 = vand.u32 %v36, 4294901760
    %413 = vmatpush.msra.mxu0 %v412
    %v414 = vand.u32 %v39, 4294901760
    %v415 = vsub.f32 %v39, %v414
    %v416 = vand.u32 %v415, 4294901760
    %417 = vmatmul.f32.gmra.mxu0 %v416
    %v418 = vpop.f32.mrf.mxu0
    %v419 = vadd.f32 %v325, %v418
    %v420 = vand.u32 %v42, 4294901760
    %v421 = vsub.f32 %v42, %v420
    %v422 = vand.u32 %v421, 4294901760
    %423 = vmatmul.f32.gmra.mxu0 %v422
    %v424 = vpop.f32.mrf.mxu0
    %v425 = vadd.f32 %v330, %v424
    %v426 = vand.u32 %v45, 4294901760
    %v427 = vsub.f32 %v45, %v426
    %v428 = vand.u32 %v427, 4294901760
    %429 = vmatmul.f32.gmra.mxu0 %v428
    %v430 = vpop.f32.mrf.mxu0
    %v431 = vadd.f32 %v335, %v430
    %v432 = vand.u32 %v48, 4294901760
    %v433 = vsub.f32 %v48, %v432
    %v434 = vand.u32 %v433, 4294901760
    %435 = vmatmul.f32.gmra.mxu0 %v434
    %v436 = vpop.f32.mrf.mxu0
    %v437 = vadd.f32 %v340, %v436
    %v438 = vand.u32 %v51, 4294901760
    %v439 = vsub.f32 %v51, %v438
    %v440 = vand.u32 %v439, 4294901760
    %441 = vmatmul.f32.gmra.mxu0 %v440
    %v442 = vpop.f32.mrf.mxu0
    %v443 = vadd.f32 %v345, %v442
    %v444 = vand.u32 %v54, 4294901760
    %v445 = vsub.f32 %v54, %v444
    %v446 = vand.u32 %v445, 4294901760
    %447 = vmatmul.f32.gmra.mxu0 %v446
    %v448 = vpop.f32.mrf.mxu0
    %v449 = vadd.f32 %v350, %v448
    %v450 = vand.u32 %v57, 4294901760
    %v451 = vsub.f32 %v57, %v450
    %v452 = vand.u32 %v451, 4294901760
    %453 = vmatmul.f32.gmra.mxu0 %v452
    %v454 = vpop.f32.mrf.mxu0
    %v455 = vadd.f32 %v355, %v454
    %v456 = vand.u32 %v60, 4294901760
    %v457 = vsub.f32 %v60, %v456
    %v458 = vand.u32 %v457, 4294901760
    %459 = vmatmul.f32.gmra.mxu0 %v458
    %v460 = vpop.f32.mrf.mxu0
    %v461 = vadd.f32 %v360, %v460
    %v462 = vand.u32 %v63, 4294901760
    %v463 = vsub.f32 %v63, %v462
    %v464 = vand.u32 %v463, 4294901760
    %465 = vmatmul.f32.gmra.mxu0 %v464
    %v466 = vpop.f32.mrf.mxu0
    %v467 = vadd.f32 %v365, %v466
    %v468 = vand.u32 %v66, 4294901760
    %v469 = vsub.f32 %v66, %v468
    %v470 = vand.u32 %v469, 4294901760
    %471 = vmatmul.f32.gmra.mxu0 %v470
    %v472 = vpop.f32.mrf.mxu0
    %v473 = vadd.f32 %v370, %v472
    %v474 = vand.u32 %v69, 4294901760
    %v475 = vsub.f32 %v69, %v474
    %v476 = vand.u32 %v475, 4294901760
    %477 = vmatmul.f32.gmra.mxu0 %v476
    %v478 = vpop.f32.mrf.mxu0
    %v479 = vadd.f32 %v375, %v478
    %v480 = vand.u32 %v72, 4294901760
    %v481 = vsub.f32 %v72, %v480
    %v482 = vand.u32 %v481, 4294901760
    %483 = vmatmul.f32.gmra.mxu0 %v482
    %v484 = vpop.f32.mrf.mxu0
    %v485 = vadd.f32 %v380, %v484
    %v486 = vand.u32 %v75, 4294901760
    %v487 = vsub.f32 %v75, %v486
    %v488 = vand.u32 %v487, 4294901760
    %489 = vmatmul.f32.gmra.mxu0 %v488
    %v490 = vpop.f32.mrf.mxu0
    %v491 = vadd.f32 %v385, %v490
    %v492 = vand.u32 %v78, 4294901760
    %v493 = vsub.f32 %v78, %v492
    %v494 = vand.u32 %v493, 4294901760
    %495 = vmatmul.f32.gmra.mxu0 %v494
    %v496 = vpop.f32.mrf.mxu0
    %v497 = vadd.f32 %v390, %v496
    %v498 = vand.u32 %v81, 4294901760
    %v499 = vsub.f32 %v81, %v498
    %v500 = vand.u32 %v499, 4294901760
    %501 = vmatmul.f32.gmra.mxu0 %v500
    %v502 = vpop.f32.mrf.mxu0
    %v503 = vadd.f32 %v395, %v502
    %504 = vdwg.mxu0
    %505 = vmatpush.msra.mxu0 0.0
    %506 = vmatpush.msra.mxu0 0.0
    %507 = vmatpush.msra.mxu0 0.0
    %508 = vmatpush.msra.mxu0 0.0
    %509 = vmatpush.msra.mxu0 0.0
    %510 = vmatpush.msra.mxu0 0.0
    %511 = vmatpush.msra.mxu0 0.0
    %512 = vmatpush.msra.mxu0 0.0
    %513 = vmatpush.msra.mxu0 0.0
    %514 = vmatpush.msra.mxu0 0.0
    %515 = vmatpush.msra.mxu0 0.0
    %516 = vmatpush.msra.mxu0 0.0
    %517 = vmatpush.msra.mxu0 0.0
    %518 = vmatpush.msra.mxu0 0.0
    %519 = vmatpush.msra.mxu0 0.0
    %v520 = vand.u32 %v36, 4294901760
    %v521 = vsub.f32 %v36, %v520
    %v522 = vand.u32 %v521, 4294901760
    %523 = vmatpush.msra.mxu0 %v522
    %v524 = vand.u32 %v39, 4294901760
    %525 = vmatmul.f32.gmra.mxu0 %v524
    %v526 = vpop.f32.mrf.mxu0
    %v527 = vadd.f32 %v419, %v526
    %v528 = vand.u32 %v42, 4294901760
    %529 = vmatmul.f32.gmra.mxu0 %v528
    %v530 = vpop.f32.mrf.mxu0
    %v531 = vadd.f32 %v425, %v530
    %v532 = vand.u32 %v45, 4294901760
    %533 = vmatmul.f32.gmra.mxu0 %v532
    %v534 = vpop.f32.mrf.mxu0
    %v535 = vadd.f32 %v431, %v534
    %v536 = vand.u32 %v48, 4294901760
    %537 = vmatmul.f32.gmra.mxu0 %v536
    %v538 = vpop.f32.mrf.mxu0
    %v539 = vadd.f32 %v437, %v538
    %v540 = vand.u32 %v51, 4294901760
    %541 = vmatmul.f32.gmra.mxu0 %v540
    %v542 = vpop.f32.mrf.mxu0
    %v543 = vadd.f32 %v443, %v542
    %v544 = vand.u32 %v54, 4294901760
    %545 = vmatmul.f32.gmra.mxu0 %v544
    %v546 = vpop.f32.mrf.mxu0
    %v547 = vadd.f32 %v449, %v546
    %v548 = vand.u32 %v57, 4294901760
    %549 = vmatmul.f32.gmra.mxu0 %v548
    %v550 = vpop.f32.mrf.mxu0
    %v551 = vadd.f32 %v455, %v550
    %v552 = vand.u32 %v60, 4294901760
    %553 = vmatmul.f32.gmra.mxu0 %v552
    %v554 = vpop.f32.mrf.mxu0
    %v555 = vadd.f32 %v461, %v554
    %v556 = vand.u32 %v63, 4294901760
    %557 = vmatmul.f32.gmra.mxu0 %v556
    %v558 = vpop.f32.mrf.mxu0
    %v559 = vadd.f32 %v467, %v558
    %v560 = vand.u32 %v66, 4294901760
    %561 = vmatmul.f32.gmra.mxu0 %v560
    %v562 = vpop.f32.mrf.mxu0
    %v563 = vadd.f32 %v473, %v562
    %v564 = vand.u32 %v69, 4294901760
    %565 = vmatmul.f32.gmra.mxu0 %v564
    %v566 = vpop.f32.mrf.mxu0
    %v567 = vadd.f32 %v479, %v566
    %v568 = vand.u32 %v72, 4294901760
    %569 = vmatmul.f32.gmra.mxu0 %v568
    %v570 = vpop.f32.mrf.mxu0
    %v571 = vadd.f32 %v485, %v570
    %v572 = vand.u32 %v75, 4294901760
    %573 = vmatmul.f32.gmra.mxu0 %v572
    %v574 = vpop.f32.mrf.mxu0
    %v575 = vadd.f32 %v491, %v574
    %v576 = vand.u32 %v78, 4294901760
    %577 = vmatmul.f32.gmra.mxu0 %v576
    %v578 = vpop.f32.mrf.mxu0
    %v579 = vadd.f32 %v497, %v578
    %v580 = vand.u32 %v81, 4294901760
    %581 = vmatmul.f32.gmra.mxu0 %v580
    %v582 = vpop.f32.mrf.mxu0
    %v583 = vadd.f32 %v503, %v582
    %584 = vdwg.mxu0
    %585 = vmatpush.msra.mxu0 0.0
    %586 = vmatpush.msra.mxu0 0.0
    %587 = vmatpush.msra.mxu0 0.0
    %588 = vmatpush.msra.mxu0 0.0
    %589 = vmatpush.msra.mxu0 0.0
    %590 = vmatpush.msra.mxu0 0.0
    %591 = vmatpush.msra.mxu0 0.0
    %592 = vmatpush.msra.mxu0 0.0
    %593 = vmatpush.msra.mxu0 0.0
    %594 = vmatpush.msra.mxu0 0.0
    %595 = vmatpush.msra.mxu0 0.0
    %596 = vmatpush.msra.mxu0 0.0
    %597 = vmatpush.msra.mxu0 0.0
    %598 = vmatpush.msra.mxu0 0.0
    %599 = vmatpush.msra.mxu0 0.0
    %v600 = vand.u32 %v36, 4294901760
    %601 = vmatpush.msra.mxu0 %v600
    %v602 = vand.u32 %v39, 4294901760
    %603 = vmatmul.f32.gmra.mxu0 %v602
    %v604 = vpop.f32.mrf.mxu0
    %v605 = vadd.f32 %v527, %v604
    %v606 = vand.u32 %v42, 4294901760
    %607 = vmatmul.f32.gmra.mxu0 %v606
    %v608 = vpop.f32.mrf.mxu0
    %v609 = vadd.f32 %v531, %v608
    %v610 = vand.u32 %v45, 4294901760
    %611 = vmatmul.f32.gmra.mxu0 %v610
    %v612 = vpop.f32.mrf.mxu0
    %v613 = vadd.f32 %v535, %v612
    %v614 = vand.u32 %v48, 4294901760
    %615 = vmatmul.f32.gmra.mxu0 %v614
    %v616 = vpop.f32.mrf.mxu0
    %v617 = vadd.f32 %v539, %v616
    %v618 = vand.u32 %v51, 4294901760
    %619 = vmatmul.f32.gmra.mxu0 %v618
    %v620 = vpop.f32.mrf.mxu0
    %v621 = vadd.f32 %v543, %v620
    %v622 = vand.u32 %v54, 4294901760
    %623 = vmatmul.f32.gmra.mxu0 %v622
    %v624 = vpop.f32.mrf.mxu0
    %v625 = vadd.f32 %v547, %v624
    %v626 = vand.u32 %v57, 4294901760
    %627 = vmatmul.f32.gmra.mxu0 %v626
    %v628 = vpop.f32.mrf.mxu0
    %v629 = vadd.f32 %v551, %v628
    %v630 = vand.u32 %v60, 4294901760
    %631 = vmatmul.f32.gmra.mxu0 %v630
    %v632 = vpop.f32.mrf.mxu0
    %v633 = vadd.f32 %v555, %v632
    %v634 = vand.u32 %v63, 4294901760
    %635 = vmatmul.f32.gmra.mxu0 %v634
    %v636 = vpop.f32.mrf.mxu0
    %v637 = vadd.f32 %v559, %v636
    %v638 = vand.u32 %v66, 4294901760
    %639 = vmatmul.f32.gmra.mxu0 %v638
    %v640 = vpop.f32.mrf.mxu0
    %v641 = vadd.f32 %v563, %v640
    %v642 = vand.u32 %v69, 4294901760
    %643 = vmatmul.f32.gmra.mxu0 %v642
    %v644 = vpop.f32.mrf.mxu0
    %v645 = vadd.f32 %v567, %v644
    %v646 = vand.u32 %v72, 4294901760
    %647 = vmatmul.f32.gmra.mxu0 %v646
    %v648 = vpop.f32.mrf.mxu0
    %v649 = vadd.f32 %v571, %v648
    %v650 = vand.u32 %v75, 4294901760
    %651 = vmatmul.f32.gmra.mxu0 %v650
    %v652 = vpop.f32.mrf.mxu0
    %v653 = vadd.f32 %v575, %v652
    %v654 = vand.u32 %v78, 4294901760
    %655 = vmatmul.f32.gmra.mxu0 %v654
    %v656 = vpop.f32.mrf.mxu0
    %v657 = vadd.f32 %v579, %v656
    %v658 = vand.u32 %v81, 4294901760
    %659 = vmatmul.f32.gmra.mxu0 %v658
    %v660 = vpop.f32.mrf.mxu0
    %v661 = vadd.f32 %v583, %v660
    %662 = vdwg.mxu0
    %v663 = vld [vmem:[%s2] sm:$0xff]
    %v664 = vld [vmem:[%s2 + $0x8] sm:$0xff]
    %v665 = vld [vmem:[%s2 + $0x10] sm:$0xff]
    %v666 = vld [vmem:[%s2 + $0x18] sm:$0xff]
    %v667 = vld [vmem:[%s2 + $0x20] sm:$0xff]
    %v668 = vld [vmem:[%s2 + $0x28] sm:$0xff]
    %v669 = vld [vmem:[%s2 + $0x30] sm:$0xff]
    %v670 = vld [vmem:[%s2 + $0x38] sm:$0xff]
    %v671 = vld [vmem:[%s2 + $0x40] sm:$0xff]
    %v672 = vld [vmem:[%s2 + $0x48] sm:$0xff]
    %v673 = vld [vmem:[%s2 + $0x50] sm:$0xff]
    %v674 = vld [vmem:[%s2 + $0x58] sm:$0xff]
    %v675 = vld [vmem:[%s2 + $0x60] sm:$0xff]
    %v676 = vld [vmem:[%s2 + $0x68] sm:$0xff]
    %v677 = vld [vmem:[%s2 + $0x70] sm:$0xff]
    %679 = vset.pattern.permute.xlu0 0
    %680 = vperm.xlu0 %679, %v663
    %v681 = vpop.permute.xlu0 %680
    %684 = vset.pattern.permute.xlu0 0
    %685 = vperm.xlu0 %684, %v664
    %v686 = vpop.permute.xlu0 %685
    %689 = vset.pattern.permute.xlu0 0
    %690 = vperm.xlu0 %689, %v665
    %v691 = vpop.permute.xlu0 %690
    %694 = vset.pattern.permute.xlu0 0
    %695 = vperm.xlu0 %694, %v666
    %v696 = vpop.permute.xlu0 %695
    %699 = vset.pattern.permute.xlu0 0
    %700 = vperm.xlu0 %699, %v667
    %v701 = vpop.permute.xlu0 %700
    %704 = vset.pattern.permute.xlu0 0
    %705 = vperm.xlu0 %704, %v668
    %v706 = vpop.permute.xlu0 %705
    %709 = vset.pattern.permute.xlu0 0
    %710 = vperm.xlu0 %709, %v669
    %v711 = vpop.permute.xlu0 %710
    %714 = vset.pattern.permute.xlu0 0
    %715 = vperm.xlu0 %714, %v670
    %v716 = vpop.permute.xlu0 %715
    %719 = vset.pattern.permute.xlu0 0
    %720 = vperm.xlu0 %719, %v671
    %v721 = vpop.permute.xlu0 %720
    %724 = vset.pattern.permute.xlu0 0
    %725 = vperm.xlu0 %724, %v672
    %v726 = vpop.permute.xlu0 %725
    %729 = vset.pattern.permute.xlu0 0
    %730 = vperm.xlu0 %729, %v673
    %v731 = vpop.permute.xlu0 %730
    %734 = vset.pattern.permute.xlu0 0
    %735 = vperm.xlu0 %734, %v674
    %v736 = vpop.permute.xlu0 %735
    %739 = vset.pattern.permute.xlu0 0
    %740 = vperm.xlu0 %739, %v675
    %v741 = vpop.permute.xlu0 %740
    %744 = vset.pattern.permute.xlu0 0
    %745 = vperm.xlu0 %744, %v676
    %v746 = vpop.permute.xlu0 %745
    %749 = vset.pattern.permute.xlu0 0
    %750 = vperm.xlu0 %749, %v677
    %v751 = vpop.permute.xlu0 %750
    %v753 = vsub.f32 %v605, %v681
    %v754 = vsub.f32 %v609, %v686
    %v755 = vsub.f32 %v613, %v691
    %v756 = vsub.f32 %v617, %v696
    %v757 = vsub.f32 %v621, %v701
    %v758 = vsub.f32 %v625, %v706
    %v759 = vsub.f32 %v629, %v711
    %v760 = vsub.f32 %v633, %v716
    %v761 = vsub.f32 %v637, %v721
    %v762 = vsub.f32 %v641, %v726
    %v763 = vsub.f32 %v645, %v731
    %v764 = vsub.f32 %v649, %v736
    %v765 = vsub.f32 %v653, %v741
    %v766 = vsub.f32 %v657, %v746
    %v767 = vsub.f32 %v661, %v751
    %v768 = vand.u32 2147483647, %v753
    %v769 = vand.u32 2147483647, %v754
    %v770 = vand.u32 2147483647, %v755
    %v771 = vand.u32 2147483647, %v756
    %v772 = vand.u32 2147483647, %v757
    %v773 = vand.u32 2147483647, %v758
    %v774 = vand.u32 2147483647, %v759
    %v775 = vand.u32 2147483647, %v760
    %v776 = vand.u32 2147483647, %v761
    %v777 = vand.u32 2147483647, %v762
    %v778 = vand.u32 2147483647, %v763
    %v779 = vand.u32 2147483647, %v764
    %v780 = vand.u32 2147483647, %v765
    %v781 = vand.u32 2147483647, %v766
    %v782 = vand.u32 2147483647, %v767
    %vm783 = vcmp.lt.f32.partialorder %v768, 0.5
    %vm784 = vcmp.lt.f32.partialorder %v769, 0.5
    %vm785 = vcmp.lt.f32.partialorder %v770, 0.5
    %vm786 = vcmp.lt.f32.partialorder %v771, 0.5
    %vm787 = vcmp.lt.f32.partialorder %v772, 0.5
    %vm788 = vcmp.lt.f32.partialorder %v773, 0.5
    %vm789 = vcmp.lt.f32.partialorder %v774, 0.5
    %vm790 = vcmp.lt.f32.partialorder %v775, 0.5
    %vm791 = vcmp.lt.f32.partialorder %v776, 0.5
    %vm792 = vcmp.lt.f32.partialorder %v777, 0.5
    %vm793 = vcmp.lt.f32.partialorder %v778, 0.5
    %vm794 = vcmp.lt.f32.partialorder %v779, 0.5
    %vm795 = vcmp.lt.f32.partialorder %v780, 0.5
    %vm796 = vcmp.lt.f32.partialorder %v781, 0.5
    %vm797 = vcmp.lt.f32.partialorder %v782, 0.5
    %v798 = vsel %vm783, 1, 0
    %v799 = vsel %vm784, 1, 0
    %v800 = vsel %vm785, 1, 0
    %v801 = vsel %vm786, 1, 0
    %v802 = vsel %vm787, 1, 0
    %v803 = vsel %vm788, 1, 0
    %v804 = vsel %vm789, 1, 0
    %v805 = vsel %vm790, 1, 0
    %v806 = vsel %vm791, 1, 0
    %v807 = vsel %vm792, 1, 0
    %v808 = vsel %vm793, 1, 0
    %v809 = vsel %vm794, 1, 0
    %v810 = vsel %vm795, 1, 0
    %v811 = vsel %vm796, 1, 0
    %v812 = vsel %vm797, 1, 0
    %v813 = vcvt.s32.f32 %v798
    %v814 = vcvt.s32.f32 %v799
    %v815 = vcvt.s32.f32 %v800
    %v816 = vcvt.s32.f32 %v801
    %v817 = vcvt.s32.f32 %v802
    %v818 = vcvt.s32.f32 %v803
    %v819 = vcvt.s32.f32 %v804
    %v820 = vcvt.s32.f32 %v805
    %v821 = vcvt.s32.f32 %v806
    %v822 = vcvt.s32.f32 %v807
    %v823 = vcvt.s32.f32 %v808
    %v824 = vcvt.s32.f32 %v809
    %v825 = vcvt.s32.f32 %v810
    %v826 = vcvt.s32.f32 %v811
    %v827 = vcvt.s32.f32 %v812
    %v828 = vld [vmem:[%s3] sm:$0xff]
    %v829 = vld [vmem:[%s3 + $0x8] sm:$0xff]
    %v830 = vld [vmem:[%s3 + $0x10] sm:$0xff]
    %v831 = vld [vmem:[%s3 + $0x18] sm:$0xff]
    %v832 = vld [vmem:[%s3 + $0x20] sm:$0xff]
    %v833 = vld [vmem:[%s3 + $0x28] sm:$0xff]
    %v834 = vld [vmem:[%s3 + $0x30] sm:$0xff]
    %v835 = vld [vmem:[%s3 + $0x38] sm:$0xff]
    %v836 = vld [vmem:[%s3 + $0x40] sm:$0xff]
    %v837 = vld [vmem:[%s3 + $0x48] sm:$0xff]
    %v838 = vld [vmem:[%s3 + $0x50] sm:$0xff]
    %v839 = vld [vmem:[%s3 + $0x58] sm:$0xff]
    %v840 = vld [vmem:[%s3 + $0x60] sm:$0xff]
    %v841 = vld [vmem:[%s3 + $0x68] sm:$0xff]
    %v842 = vld [vmem:[%s3 + $0x70] sm:$0xff]
    %v843 = vld [vmem:[%s3 + $0x78] sm:$0xff]
    %v844 = vld [vmem:[%s3 + $0x80] sm:$0xff]
    %v845 = vld [vmem:[%s3 + $0x88] sm:$0xff]
    %v846 = vld [vmem:[%s3 + $0x90] sm:$0xff]
    %v847 = vld [vmem:[%s3 + $0x98] sm:$0xff]
    %v848 = vld [vmem:[%s3 + $0xa0] sm:$0xff]
    %v849 = vld [vmem:[%s3 + $0xa8] sm:$0xff]
    %v850 = vld [vmem:[%s3 + $0xb0] sm:$0xff]
    %v851 = vld [vmem:[%s3 + $0xb8] sm:$0xff]
    %v852 = vld [vmem:[%s3 + $0xc0] sm:$0xff]
    %v853 = vld [vmem:[%s3 + $0xc8] sm:$0xff]
    %v854 = vld [vmem:[%s3 + $0xd0] sm:$0xff]
    %v855 = vld [vmem:[%s3 + $0xd8] sm:$0xff]
    %v856 = vld [vmem:[%s3 + $0xe0] sm:$0xff]
    %v857 = vld [vmem:[%s3 + $0xe8] sm:$0xff]
    %v858 = vld [vmem:[%s4] sm:$0xff]
    %v859 = vld [vmem:[%s4 + $0x8] sm:$0xff]
    %v860 = vld [vmem:[%s4 + $0x10] sm:$0xff]
    %v861 = vld [vmem:[%s4 + $0x18] sm:$0xff]
    %v862 = vld [vmem:[%s4 + $0x20] sm:$0xff]
    %v863 = vld [vmem:[%s4 + $0x28] sm:$0xff]
    %v864 = vld [vmem:[%s4 + $0x30] sm:$0xff]
    %v865 = vld [vmem:[%s4 + $0x38] sm:$0xff]
    %v866 = vld [vmem:[%s4 + $0x40] sm:$0xff]
    %v867 = vld [vmem:[%s4 + $0x48] sm:$0xff]
    %v868 = vld [vmem:[%s4 + $0x50] sm:$0xff]
    %v869 = vld [vmem:[%s4 + $0x58] sm:$0xff]
    %v870 = vld [vmem:[%s4 + $0x60] sm:$0xff]
    %v871 = vld [vmem:[%s4 + $0x68] sm:$0xff]
    %v872 = vld [vmem:[%s4 + $0x70] sm:$0xff]
    %v873 = vld [vmem:[%s4 + $0x78] sm:$0xff]
    %v874 = vld [vmem:[%s4 + $0x80] sm:$0xff]
    %v875 = vld [vmem:[%s4 + $0x88] sm:$0xff]
    %v876 = vld [vmem:[%s4 + $0x90] sm:$0xff]
    %v877 = vld [vmem:[%s4 + $0x98] sm:$0xff]
    %v878 = vld [vmem:[%s4 + $0xa0] sm:$0xff]
    %v879 = vld [vmem:[%s4 + $0xa8] sm:$0xff]
    %v880 = vld [vmem:[%s4 + $0xb0] sm:$0xff]
    %v881 = vld [vmem:[%s4 + $0xb8] sm:$0xff]
    %v882 = vld [vmem:[%s4 + $0xc0] sm:$0xff]
    %v883 = vld [vmem:[%s4 + $0xc8] sm:$0xff]
    %v884 = vld [vmem:[%s4 + $0xd0] sm:$0xff]
    %v885 = vld [vmem:[%s4 + $0xd8] sm:$0xff]
    %v886 = vld [vmem:[%s4 + $0xe0] sm:$0xff]
    %v887 = vld [vmem:[%s4 + $0xe8] sm:$0xff]
    %889 = vset.pattern.permute.xlu0 0
    %890 = vperm.xlu0 %889, %v858
    %v891 = vpop.permute.xlu0 %890
    %894 = vset.pattern.permute.xlu0 0
    %895 = vperm.xlu0 %894, %v859
    %v896 = vpop.permute.xlu0 %895
    %899 = vset.pattern.permute.xlu0 0
    %900 = vperm.xlu0 %899, %v860
    %v901 = vpop.permute.xlu0 %900
    %904 = vset.pattern.permute.xlu0 0
    %905 = vperm.xlu0 %904, %v861
    %v906 = vpop.permute.xlu0 %905
    %909 = vset.pattern.permute.xlu0 0
    %910 = vperm.xlu0 %909, %v862
    %v911 = vpop.permute.xlu0 %910
    %914 = vset.pattern.permute.xlu0 0
    %915 = vperm.xlu0 %914, %v863
    %v916 = vpop.permute.xlu0 %915
    %919 = vset.pattern.permute.xlu0 0
    %920 = vperm.xlu0 %919, %v864
    %v921 = vpop.permute.xlu0 %920
    %924 = vset.pattern.permute.xlu0 0
    %925 = vperm.xlu0 %924, %v865
    %v926 = vpop.permute.xlu0 %925
    %929 = vset.pattern.permute.xlu0 0
    %930 = vperm.xlu0 %929, %v866
    %v931 = vpop.permute.xlu0 %930
    %934 = vset.pattern.permute.xlu0 0
    %935 = vperm.xlu0 %934, %v867
    %v936 = vpop.permute.xlu0 %935
    %939 = vset.pattern.permute.xlu0 0
    %940 = vperm.xlu0 %939, %v868
    %v941 = vpop.permute.xlu0 %940
    %944 = vset.pattern.permute.xlu0 0
    %945 = vperm.xlu0 %944, %v869
    %v946 = vpop.permute.xlu0 %945
    %949 = vset.pattern.permute.xlu0 0
    %950 = vperm.xlu0 %949, %v870
    %v951 = vpop.permute.xlu0 %950
    %954 = vset.pattern.permute.xlu0 0
    %955 = vperm.xlu0 %954, %v871
    %v956 = vpop.permute.xlu0 %955
    %959 = vset.pattern.permute.xlu0 0
    %960 = vperm.xlu0 %959, %v872
    %v961 = vpop.permute.xlu0 %960
    %964 = vset.pattern.permute.xlu0 0
    %965 = vperm.xlu0 %964, %v873
    %v966 = vpop.permute.xlu0 %965
    %969 = vset.pattern.permute.xlu0 0
    %970 = vperm.xlu0 %969, %v874
    %v971 = vpop.permute.xlu0 %970
    %974 = vset.pattern.permute.xlu0 0
    %975 = vperm.xlu0 %974, %v875
    %v976 = vpop.permute.xlu0 %975
    %979 = vset.pattern.permute.xlu0 0
    %980 = vperm.xlu0 %979, %v876
    %v981 = vpop.permute.xlu0 %980
    %984 = vset.pattern.permute.xlu0 0
    %985 = vperm.xlu0 %984, %v877
    %v986 = vpop.permute.xlu0 %985
    %989 = vset.pattern.permute.xlu0 0
    %990 = vperm.xlu0 %989, %v878
    %v991 = vpop.permute.xlu0 %990
    %994 = vset.pattern.permute.xlu0 0
    %995 = vperm.xlu0 %994, %v879
    %v996 = vpop.permute.xlu0 %995
    %999 = vset.pattern.permute.xlu0 0
    %1000 = vperm.xlu0 %999, %v880
    %v1001 = vpop.permute.xlu0 %1000
    %1004 = vset.pattern.permute.xlu0 0
    %1005 = vperm.xlu0 %1004, %v881
    %v1006 = vpop.permute.xlu0 %1005
    %1009 = vset.pattern.permute.xlu0 0
    %1010 = vperm.xlu0 %1009, %v882
    %v1011 = vpop.permute.xlu0 %1010
    %1014 = vset.pattern.permute.xlu0 0
    %1015 = vperm.xlu0 %1014, %v883
    %v1016 = vpop.permute.xlu0 %1015
    %1019 = vset.pattern.permute.xlu0 0
    %1020 = vperm.xlu0 %1019, %v884
    %v1021 = vpop.permute.xlu0 %1020
    %1024 = vset.pattern.permute.xlu0 0
    %1025 = vperm.xlu0 %1024, %v885
    %v1026 = vpop.permute.xlu0 %1025
    %1029 = vset.pattern.permute.xlu0 0
    %1030 = vperm.xlu0 %1029, %v886
    %v1031 = vpop.permute.xlu0 %1030
    %1034 = vset.pattern.permute.xlu0 0
    %1035 = vperm.xlu0 %1034, %v887
    %v1036 = vpop.permute.xlu0 %1035
    %vm1038 = vcmask 982016
    %v1040 = vsel %vm1038, %v828, 0
    %v1043 = vsel %vm1038, %v829, 0
    %v1046 = vsel %vm1038, %v830, 0
    %v1049 = vsel %vm1038, %v831, 0
    %v1052 = vsel %vm1038, %v832, 0
    %v1055 = vsel %vm1038, %v833, 0
    %v1058 = vsel %vm1038, %v834, 0
    %v1061 = vsel %vm1038, %v835, 0
    %v1064 = vsel %vm1038, %v836, 0
    %v1067 = vsel %vm1038, %v837, 0
    %v1070 = vsel %vm1038, %v838, 0
    %v1073 = vsel %vm1038, %v839, 0
    %v1076 = vsel %vm1038, %v840, 0
    %v1079 = vsel %vm1038, %v841, 0
    %v1082 = vsel %vm1038, %v842, 0
    %v1085 = vsel %vm1038, %v843, 0
    %v1088 = vsel %vm1038, %v844, 0
    %v1091 = vsel %vm1038, %v845, 0
    %v1094 = vsel %vm1038, %v846, 0
    %v1097 = vsel %vm1038, %v847, 0
    %v1100 = vsel %vm1038, %v848, 0
    %v1103 = vsel %vm1038, %v849, 0
    %v1106 = vsel %vm1038, %v850, 0
    %v1109 = vsel %vm1038, %v851, 0
    %v1112 = vsel %vm1038, %v852, 0
    %v1115 = vsel %vm1038, %v853, 0
    %v1118 = vsel %vm1038, %v854, 0
    %v1121 = vsel %vm1038, %v855, 0
    %v1124 = vsel %vm1038, %v856, 0
    %v1127 = vsel %vm1038, %v857, 0
    %1129 = vmatpush.msra.mxu0 0.0
    %v1130 = vand.u32 %v827, 4294901760
    %1131 = vmatpush.msra.mxu0 %v1130
    %v1132 = vand.u32 %v826, 4294901760
    %1133 = vmatpush.msra.mxu0 %v1132
    %v1134 = vand.u32 %v825, 4294901760
    %1135 = vmatpush.msra.mxu0 %v1134
    %v1136 = vand.u32 %v824, 4294901760
    %1137 = vmatpush.msra.mxu0 %v1136
    %v1138 = vand.u32 %v823, 4294901760
    %1139 = vmatpush.msra.mxu0 %v1138
    %v1140 = vand.u32 %v822, 4294901760
    %1141 = vmatpush.msra.mxu0 %v1140
    %v1142 = vand.u32 %v821, 4294901760
    %1143 = vmatpush.msra.mxu0 %v1142
    %v1144 = vand.u32 %v820, 4294901760
    %1145 = vmatpush.msra.mxu0 %v1144
    %v1146 = vand.u32 %v819, 4294901760
    %1147 = vmatpush.msra.mxu0 %v1146
    %v1148 = vand.u32 %v818, 4294901760
    %1149 = vmatpush.msra.mxu0 %v1148
    %v1150 = vand.u32 %v817, 4294901760
    %1151 = vmatpush.msra.mxu0 %v1150
    %v1152 = vand.u32 %v816, 4294901760
    %1153 = vmatpush.msra.mxu0 %v1152
    %v1154 = vand.u32 %v815, 4294901760
    %1155 = vmatpush.msra.mxu0 %v1154
    %v1156 = vand.u32 %v814, 4294901760
    %1157 = vmatpush.msra.mxu0 %v1156
    %v1158 = vand.u32 %v813, 4294901760
    %1159 = vmatpush.msra.mxu0 %v1158
    %v1160 = vand.u32 %v1040, 4294901760
    %v1161 = vsub.f32 %v1040, %v1160
    %v1162 = vand.u32 %v1161, 4294901760
    %v1163 = vsub.f32 %v1161, %v1162
    %v1164 = vand.u32 %v1163, 4294901760
    %1165 = vmatmul.f32.gmra.mxu0 %v1164
    %v1166 = vpop.f32.mrf.mxu0
    %v1167 = vadd.f32 %v891, %v1166
    %v1168 = vand.u32 %v1043, 4294901760
    %v1169 = vsub.f32 %v1043, %v1168
    %v1170 = vand.u32 %v1169, 4294901760
    %v1171 = vsub.f32 %v1169, %v1170
    %v1172 = vand.u32 %v1171, 4294901760
    %1173 = vmatmul.f32.gmra.mxu0 %v1172
    %v1174 = vpop.f32.mrf.mxu0
    %v1175 = vadd.f32 %v896, %v1174
    %v1176 = vand.u32 %v1046, 4294901760
    %v1177 = vsub.f32 %v1046, %v1176
    %v1178 = vand.u32 %v1177, 4294901760
    %v1179 = vsub.f32 %v1177, %v1178
    %v1180 = vand.u32 %v1179, 4294901760
    %1181 = vmatmul.f32.gmra.mxu0 %v1180
    %v1182 = vpop.f32.mrf.mxu0
    %v1183 = vadd.f32 %v901, %v1182
    %v1184 = vand.u32 %v1049, 4294901760
    %v1185 = vsub.f32 %v1049, %v1184
    %v1186 = vand.u32 %v1185, 4294901760
    %v1187 = vsub.f32 %v1185, %v1186
    %v1188 = vand.u32 %v1187, 4294901760
    %1189 = vmatmul.f32.gmra.mxu0 %v1188
    %v1190 = vpop.f32.mrf.mxu0
    %v1191 = vadd.f32 %v906, %v1190
    %v1192 = vand.u32 %v1052, 4294901760
    %v1193 = vsub.f32 %v1052, %v1192
    %v1194 = vand.u32 %v1193, 4294901760
    %v1195 = vsub.f32 %v1193, %v1194
    %v1196 = vand.u32 %v1195, 4294901760
    %1197 = vmatmul.f32.gmra.mxu0 %v1196
    %v1198 = vpop.f32.mrf.mxu0
    %v1199 = vadd.f32 %v911, %v1198
    %v1200 = vand.u32 %v1055, 4294901760
    %v1201 = vsub.f32 %v1055, %v1200
    %v1202 = vand.u32 %v1201, 4294901760
    %v1203 = vsub.f32 %v1201, %v1202
    %v1204 = vand.u32 %v1203, 4294901760
    %1205 = vmatmul.f32.gmra.mxu0 %v1204
    %v1206 = vpop.f32.mrf.mxu0
    %v1207 = vadd.f32 %v916, %v1206
    %v1208 = vand.u32 %v1058, 4294901760
    %v1209 = vsub.f32 %v1058, %v1208
    %v1210 = vand.u32 %v1209, 4294901760
    %v1211 = vsub.f32 %v1209, %v1210
    %v1212 = vand.u32 %v1211, 4294901760
    %1213 = vmatmul.f32.gmra.mxu0 %v1212
    %v1214 = vpop.f32.mrf.mxu0
    %v1215 = vadd.f32 %v921, %v1214
    %v1216 = vand.u32 %v1061, 4294901760
    %v1217 = vsub.f32 %v1061, %v1216
    %v1218 = vand.u32 %v1217, 4294901760
    %v1219 = vsub.f32 %v1217, %v1218
    %v1220 = vand.u32 %v1219, 4294901760
    %1221 = vmatmul.f32.gmra.mxu0 %v1220
    %v1222 = vpop.f32.mrf.mxu0
    %v1223 = vadd.f32 %v926, %v1222
    %v1224 = vand.u32 %v1064, 4294901760
    %v1225 = vsub.f32 %v1064, %v1224
    %v1226 = vand.u32 %v1225, 4294901760
    %v1227 = vsub.f32 %v1225, %v1226
    %v1228 = vand.u32 %v1227, 4294901760
    %1229 = vmatmul.f32.gmra.mxu0 %v1228
    %v1230 = vpop.f32.mrf.mxu0
    %v1231 = vadd.f32 %v931, %v1230
    %v1232 = vand.u32 %v1067, 4294901760
    %v1233 = vsub.f32 %v1067, %v1232
    %v1234 = vand.u32 %v1233, 4294901760
    %v1235 = vsub.f32 %v1233, %v1234
    %v1236 = vand.u32 %v1235, 4294901760
    %1237 = vmatmul.f32.gmra.mxu0 %v1236
    %v1238 = vpop.f32.mrf.mxu0
    %v1239 = vadd.f32 %v936, %v1238
    %v1240 = vand.u32 %v1070, 4294901760
    %v1241 = vsub.f32 %v1070, %v1240
    %v1242 = vand.u32 %v1241, 4294901760
    %v1243 = vsub.f32 %v1241, %v1242
    %v1244 = vand.u32 %v1243, 4294901760
    %1245 = vmatmul.f32.gmra.mxu0 %v1244
    %v1246 = vpop.f32.mrf.mxu0
    %v1247 = vadd.f32 %v941, %v1246
    %v1248 = vand.u32 %v1073, 4294901760
    %v1249 = vsub.f32 %v1073, %v1248
    %v1250 = vand.u32 %v1249, 4294901760
    %v1251 = vsub.f32 %v1249, %v1250
    %v1252 = vand.u32 %v1251, 4294901760
    %1253 = vmatmul.f32.gmra.mxu0 %v1252
    %v1254 = vpop.f32.mrf.mxu0
    %v1255 = vadd.f32 %v946, %v1254
    %v1256 = vand.u32 %v1076, 4294901760
    %v1257 = vsub.f32 %v1076, %v1256
    %v1258 = vand.u32 %v1257, 4294901760
    %v1259 = vsub.f32 %v1257, %v1258
    %v1260 = vand.u32 %v1259, 4294901760
    %1261 = vmatmul.f32.gmra.mxu0 %v1260
    %v1262 = vpop.f32.mrf.mxu0
    %v1263 = vadd.f32 %v951, %v1262
    %v1264 = vand.u32 %v1079, 4294901760
    %v1265 = vsub.f32 %v1079, %v1264
    %v1266 = vand.u32 %v1265, 4294901760
    %v1267 = vsub.f32 %v1265, %v1266
    %v1268 = vand.u32 %v1267, 4294901760
    %1269 = vmatmul.f32.gmra.mxu0 %v1268
    %v1270 = vpop.f32.mrf.mxu0
    %v1271 = vadd.f32 %v956, %v1270
    %v1272 = vand.u32 %v1082, 4294901760
    %v1273 = vsub.f32 %v1082, %v1272
    %v1274 = vand.u32 %v1273, 4294901760
    %v1275 = vsub.f32 %v1273, %v1274
    %v1276 = vand.u32 %v1275, 4294901760
    %1277 = vmatmul.f32.gmra.mxu0 %v1276
    %v1278 = vpop.f32.mrf.mxu0
    %v1279 = vadd.f32 %v961, %v1278
    %v1280 = vand.u32 %v1085, 4294901760
    %v1281 = vsub.f32 %v1085, %v1280
    %v1282 = vand.u32 %v1281, 4294901760
    %v1283 = vsub.f32 %v1281, %v1282
    %v1284 = vand.u32 %v1283, 4294901760
    %1285 = vmatmul.f32.gmra.mxu0 %v1284
    %v1286 = vpop.f32.mrf.mxu0
    %v1287 = vadd.f32 %v966, %v1286
    %v1288 = vand.u32 %v1088, 4294901760
    %v1289 = vsub.f32 %v1088, %v1288
    %v1290 = vand.u32 %v1289, 4294901760
    %v1291 = vsub.f32 %v1289, %v1290
    %v1292 = vand.u32 %v1291, 4294901760
    %1293 = vmatmul.f32.gmra.mxu0 %v1292
    %v1294 = vpop.f32.mrf.mxu0
    %v1295 = vadd.f32 %v971, %v1294
    %v1296 = vand.u32 %v1091, 4294901760
    %v1297 = vsub.f32 %v1091, %v1296
    %v1298 = vand.u32 %v1297, 4294901760
    %v1299 = vsub.f32 %v1297, %v1298
    %v1300 = vand.u32 %v1299, 4294901760
    %1301 = vmatmul.f32.gmra.mxu0 %v1300
    %v1302 = vpop.f32.mrf.mxu0
    %v1303 = vadd.f32 %v976, %v1302
    %v1304 = vand.u32 %v1094, 4294901760
    %v1305 = vsub.f32 %v1094, %v1304
    %v1306 = vand.u32 %v1305, 4294901760
    %v1307 = vsub.f32 %v1305, %v1306
    %v1308 = vand.u32 %v1307, 4294901760
    %1309 = vmatmul.f32.gmra.mxu0 %v1308
    %v1310 = vpop.f32.mrf.mxu0
    %v1311 = vadd.f32 %v981, %v1310
    %v1312 = vand.u32 %v1097, 4294901760
    %v1313 = vsub.f32 %v1097, %v1312
    %v1314 = vand.u32 %v1313, 4294901760
    %v1315 = vsub.f32 %v1313, %v1314
    %v1316 = vand.u32 %v1315, 4294901760
    %1317 = vmatmul.f32.gmra.mxu0 %v1316
    %v1318 = vpop.f32.mrf.mxu0
    %v1319 = vadd.f32 %v986, %v1318
    %v1320 = vand.u32 %v1100, 4294901760
    %v1321 = vsub.f32 %v1100, %v1320
    %v1322 = vand.u32 %v1321, 4294901760
    %v1323 = vsub.f32 %v1321, %v1322
    %v1324 = vand.u32 %v1323, 4294901760
    %1325 = vmatmul.f32.gmra.mxu0 %v1324
    %v1326 = vpop.f32.mrf.mxu0
    %v1327 = vadd.f32 %v991, %v1326
    %v1328 = vand.u32 %v1103, 4294901760
    %v1329 = vsub.f32 %v1103, %v1328
    %v1330 = vand.u32 %v1329, 4294901760
    %v1331 = vsub.f32 %v1329, %v1330
    %v1332 = vand.u32 %v1331, 4294901760
    %1333 = vmatmul.f32.gmra.mxu0 %v1332
    %v1334 = vpop.f32.mrf.mxu0
    %v1335 = vadd.f32 %v996, %v1334
    %v1336 = vand.u32 %v1106, 4294901760
    %v1337 = vsub.f32 %v1106, %v1336
    %v1338 = vand.u32 %v1337, 4294901760
    %v1339 = vsub.f32 %v1337, %v1338
    %v1340 = vand.u32 %v1339, 4294901760
    %1341 = vmatmul.f32.gmra.mxu0 %v1340
    %v1342 = vpop.f32.mrf.mxu0
    %v1343 = vadd.f32 %v1001, %v1342
    %v1344 = vand.u32 %v1109, 4294901760
    %v1345 = vsub.f32 %v1109, %v1344
    %v1346 = vand.u32 %v1345, 4294901760
    %v1347 = vsub.f32 %v1345, %v1346
    %v1348 = vand.u32 %v1347, 4294901760
    %1349 = vmatmul.f32.gmra.mxu0 %v1348
    %v1350 = vpop.f32.mrf.mxu0
    %v1351 = vadd.f32 %v1006, %v1350
    %v1352 = vand.u32 %v1112, 4294901760
    %v1353 = vsub.f32 %v1112, %v1352
    %v1354 = vand.u32 %v1353, 4294901760
    %v1355 = vsub.f32 %v1353, %v1354
    %v1356 = vand.u32 %v1355, 4294901760
    %1357 = vmatmul.f32.gmra.mxu0 %v1356
    %v1358 = vpop.f32.mrf.mxu0
    %v1359 = vadd.f32 %v1011, %v1358
    %v1360 = vand.u32 %v1115, 4294901760
    %v1361 = vsub.f32 %v1115, %v1360
    %v1362 = vand.u32 %v1361, 4294901760
    %v1363 = vsub.f32 %v1361, %v1362
    %v1364 = vand.u32 %v1363, 4294901760
    %1365 = vmatmul.f32.gmra.mxu0 %v1364
    %v1366 = vpop.f32.mrf.mxu0
    %v1367 = vadd.f32 %v1016, %v1366
    %v1368 = vand.u32 %v1118, 4294901760
    %v1369 = vsub.f32 %v1118, %v1368
    %v1370 = vand.u32 %v1369, 4294901760
    %v1371 = vsub.f32 %v1369, %v1370
    %v1372 = vand.u32 %v1371, 4294901760
    %1373 = vmatmul.f32.gmra.mxu0 %v1372
    %v1374 = vpop.f32.mrf.mxu0
    %v1375 = vadd.f32 %v1021, %v1374
    %v1376 = vand.u32 %v1121, 4294901760
    %v1377 = vsub.f32 %v1121, %v1376
    %v1378 = vand.u32 %v1377, 4294901760
    %v1379 = vsub.f32 %v1377, %v1378
    %v1380 = vand.u32 %v1379, 4294901760
    %1381 = vmatmul.f32.gmra.mxu0 %v1380
    %v1382 = vpop.f32.mrf.mxu0
    %v1383 = vadd.f32 %v1026, %v1382
    %v1384 = vand.u32 %v1124, 4294901760
    %v1385 = vsub.f32 %v1124, %v1384
    %v1386 = vand.u32 %v1385, 4294901760
    %v1387 = vsub.f32 %v1385, %v1386
    %v1388 = vand.u32 %v1387, 4294901760
    %1389 = vmatmul.f32.gmra.mxu0 %v1388
    %v1390 = vpop.f32.mrf.mxu0
    %v1391 = vadd.f32 %v1031, %v1390
    %v1392 = vand.u32 %v1127, 4294901760
    %v1393 = vsub.f32 %v1127, %v1392
    %v1394 = vand.u32 %v1393, 4294901760
    %v1395 = vsub.f32 %v1393, %v1394
    %v1396 = vand.u32 %v1395, 4294901760
    %1397 = vmatmul.f32.gmra.mxu0 %v1396
    %v1398 = vpop.f32.mrf.mxu0
    %v1399 = vadd.f32 %v1036, %v1398
    %1400 = vdwg.mxu0
    %1401 = vmatpush.msra.mxu0 0.0
    %v1402 = vand.u32 %v827, 4294901760
    %v1403 = vsub.f32 %v827, %v1402
    %v1404 = vand.u32 %v1403, 4294901760
    %v1405 = vsub.f32 %v1403, %v1404
    %v1406 = vand.u32 %v1405, 4294901760
    %1407 = vmatpush.msra.mxu0 %v1406
    %v1408 = vand.u32 %v826, 4294901760
    %v1409 = vsub.f32 %v826, %v1408
    %v1410 = vand.u32 %v1409, 4294901760
    %v1411 = vsub.f32 %v1409, %v1410
    %v1412 = vand.u32 %v1411, 4294901760
    %1413 = vmatpush.msra.mxu0 %v1412
    %v1414 = vand.u32 %v825, 4294901760
    %v1415 = vsub.f32 %v825, %v1414
    %v1416 = vand.u32 %v1415, 4294901760
    %v1417 = vsub.f32 %v1415, %v1416
    %v1418 = vand.u32 %v1417, 4294901760
    %1419 = vmatpush.msra.mxu0 %v1418
    %v1420 = vand.u32 %v824, 4294901760
    %v1421 = vsub.f32 %v824, %v1420
    %v1422 = vand.u32 %v1421, 4294901760
    %v1423 = vsub.f32 %v1421, %v1422
    %v1424 = vand.u32 %v1423, 4294901760
    %1425 = vmatpush.msra.mxu0 %v1424
    %v1426 = vand.u32 %v823, 4294901760
    %v1427 = vsub.f32 %v823, %v1426
    %v1428 = vand.u32 %v1427, 4294901760
    %v1429 = vsub.f32 %v1427, %v1428
    %v1430 = vand.u32 %v1429, 4294901760
    %1431 = vmatpush.msra.mxu0 %v1430
    %v1432 = vand.u32 %v822, 4294901760
    %v1433 = vsub.f32 %v822, %v1432
    %v1434 = vand.u32 %v1433, 4294901760
    %v1435 = vsub.f32 %v1433, %v1434
    %v1436 = vand.u32 %v1435, 4294901760
    %1437 = vmatpush.msra.mxu0 %v1436
    %v1438 = vand.u32 %v821, 4294901760
    %v1439 = vsub.f32 %v821, %v1438
    %v1440 = vand.u32 %v1439, 4294901760
    %v1441 = vsub.f32 %v1439, %v1440
    %v1442 = vand.u32 %v1441, 4294901760
    %1443 = vmatpush.msra.mxu0 %v1442
    %v1444 = vand.u32 %v820, 4294901760
    %v1445 = vsub.f32 %v820, %v1444
    %v1446 = vand.u32 %v1445, 4294901760
    %v1447 = vsub.f32 %v1445, %v1446
    %v1448 = vand.u32 %v1447, 4294901760
    %1449 = vmatpush.msra.mxu0 %v1448
    %v1450 = vand.u32 %v819, 4294901760
    %v1451 = vsub.f32 %v819, %v1450
    %v1452 = vand.u32 %v1451, 4294901760
    %v1453 = vsub.f32 %v1451, %v1452
    %v1454 = vand.u32 %v1453, 4294901760
    %1455 = vmatpush.msra.mxu0 %v1454
    %v1456 = vand.u32 %v818, 4294901760
    %v1457 = vsub.f32 %v818, %v1456
    %v1458 = vand.u32 %v1457, 4294901760
    %v1459 = vsub.f32 %v1457, %v1458
    %v1460 = vand.u32 %v1459, 4294901760
    %1461 = vmatpush.msra.mxu0 %v1460
    %v1462 = vand.u32 %v817, 4294901760
    %v1463 = vsub.f32 %v817, %v1462
    %v1464 = vand.u32 %v1463, 4294901760
    %v1465 = vsub.f32 %v1463, %v1464
    %v1466 = vand.u32 %v1465, 4294901760
    %1467 = vmatpush.msra.mxu0 %v1466
    %v1468 = vand.u32 %v816, 4294901760
    %v1469 = vsub.f32 %v816, %v1468
    %v1470 = vand.u32 %v1469, 4294901760
    %v1471 = vsub.f32 %v1469, %v1470
    %v1472 = vand.u32 %v1471, 4294901760
    %1473 = vmatpush.msra.mxu0 %v1472
    %v1474 = vand.u32 %v815, 4294901760
    %v1475 = vsub.f32 %v815, %v1474
    %v1476 = vand.u32 %v1475, 4294901760
    %v1477 = vsub.f32 %v1475, %v1476
    %v1478 = vand.u32 %v1477, 4294901760
    %1479 = vmatpush.msra.mxu0 %v1478
    %v1480 = vand.u32 %v814, 4294901760
    %v1481 = vsub.f32 %v814, %v1480
    %v1482 = vand.u32 %v1481, 4294901760
    %v1483 = vsub.f32 %v1481, %v1482
    %v1484 = vand.u32 %v1483, 4294901760
    %1485 = vmatpush.msra.mxu0 %v1484
    %v1486 = vand.u32 %v813, 4294901760
    %v1487 = vsub.f32 %v813, %v1486
    %v1488 = vand.u32 %v1487, 4294901760
    %v1489 = vsub.f32 %v1487, %v1488
    %v1490 = vand.u32 %v1489, 4294901760
    %1491 = vmatpush.msra.mxu0 %v1490
    %v1492 = vand.u32 %v1040, 4294901760
    %1493 = vmatmul.f32.gmra.mxu0 %v1492
    %v1494 = vpop.f32.mrf.mxu0
    %v1495 = vadd.f32 %v1167, %v1494
    %v1496 = vand.u32 %v1043, 4294901760
    %1497 = vmatmul.f32.gmra.mxu0 %v1496
    %v1498 = vpop.f32.mrf.mxu0
    %v1499 = vadd.f32 %v1175, %v1498
    %v1500 = vand.u32 %v1046, 4294901760
    %1501 = vmatmul.f32.gmra.mxu0 %v1500
    %v1502 = vpop.f32.mrf.mxu0
    %v1503 = vadd.f32 %v1183, %v1502
    %v1504 = vand.u32 %v1049, 4294901760
    %1505 = vmatmul.f32.gmra.mxu0 %v1504
    %v1506 = vpop.f32.mrf.mxu0
    %v1507 = vadd.f32 %v1191, %v1506
    %v1508 = vand.u32 %v1052, 4294901760
    %1509 = vmatmul.f32.gmra.mxu0 %v1508
    %v1510 = vpop.f32.mrf.mxu0
    %v1511 = vadd.f32 %v1199, %v1510
    %v1512 = vand.u32 %v1055, 4294901760
    %1513 = vmatmul.f32.gmra.mxu0 %v1512
    %v1514 = vpop.f32.mrf.mxu0
    %v1515 = vadd.f32 %v1207, %v1514
    %v1516 = vand.u32 %v1058, 4294901760
    %1517 = vmatmul.f32.gmra.mxu0 %v1516
    %v1518 = vpop.f32.mrf.mxu0
    %v1519 = vadd.f32 %v1215, %v1518
    %v1520 = vand.u32 %v1061, 4294901760
    %1521 = vmatmul.f32.gmra.mxu0 %v1520
    %v1522 = vpop.f32.mrf.mxu0
    %v1523 = vadd.f32 %v1223, %v1522
    %v1524 = vand.u32 %v1064, 4294901760
    %1525 = vmatmul.f32.gmra.mxu0 %v1524
    %v1526 = vpop.f32.mrf.mxu0
    %v1527 = vadd.f32 %v1231, %v1526
    %v1528 = vand.u32 %v1067, 4294901760
    %1529 = vmatmul.f32.gmra.mxu0 %v1528
    %v1530 = vpop.f32.mrf.mxu0
    %v1531 = vadd.f32 %v1239, %v1530
    %v1532 = vand.u32 %v1070, 4294901760
    %1533 = vmatmul.f32.gmra.mxu0 %v1532
    %v1534 = vpop.f32.mrf.mxu0
    %v1535 = vadd.f32 %v1247, %v1534
    %v1536 = vand.u32 %v1073, 4294901760
    %1537 = vmatmul.f32.gmra.mxu0 %v1536
    %v1538 = vpop.f32.mrf.mxu0
    %v1539 = vadd.f32 %v1255, %v1538
    %v1540 = vand.u32 %v1076, 4294901760
    %1541 = vmatmul.f32.gmra.mxu0 %v1540
    %v1542 = vpop.f32.mrf.mxu0
    %v1543 = vadd.f32 %v1263, %v1542
    %v1544 = vand.u32 %v1079, 4294901760
    %1545 = vmatmul.f32.gmra.mxu0 %v1544
    %v1546 = vpop.f32.mrf.mxu0
    %v1547 = vadd.f32 %v1271, %v1546
    %v1548 = vand.u32 %v1082, 4294901760
    %1549 = vmatmul.f32.gmra.mxu0 %v1548
    %v1550 = vpop.f32.mrf.mxu0
    %v1551 = vadd.f32 %v1279, %v1550
    %v1552 = vand.u32 %v1085, 4294901760
    %1553 = vmatmul.f32.gmra.mxu0 %v1552
    %v1554 = vpop.f32.mrf.mxu0
    %v1555 = vadd.f32 %v1287, %v1554
    %v1556 = vand.u32 %v1088, 4294901760
    %1557 = vmatmul.f32.gmra.mxu0 %v1556
    %v1558 = vpop.f32.mrf.mxu0
    %v1559 = vadd.f32 %v1295, %v1558
    %v1560 = vand.u32 %v1091, 4294901760
    %1561 = vmatmul.f32.gmra.mxu0 %v1560
    %v1562 = vpop.f32.mrf.mxu0
    %v1563 = vadd.f32 %v1303, %v1562
    %v1564 = vand.u32 %v1094, 4294901760
    %1565 = vmatmul.f32.gmra.mxu0 %v1564
    %v1566 = vpop.f32.mrf.mxu0
    %v1567 = vadd.f32 %v1311, %v1566
    %v1568 = vand.u32 %v1097, 4294901760
    %1569 = vmatmul.f32.gmra.mxu0 %v1568
    %v1570 = vpop.f32.mrf.mxu0
    %v1571 = vadd.f32 %v1319, %v1570
    %v1572 = vand.u32 %v1100, 4294901760
    %1573 = vmatmul.f32.gmra.mxu0 %v1572
    %v1574 = vpop.f32.mrf.mxu0
    %v1575 = vadd.f32 %v1327, %v1574
    %v1576 = vand.u32 %v1103, 4294901760
    %1577 = vmatmul.f32.gmra.mxu0 %v1576
    %v1578 = vpop.f32.mrf.mxu0
    %v1579 = vadd.f32 %v1335, %v1578
    %v1580 = vand.u32 %v1106, 4294901760
    %1581 = vmatmul.f32.gmra.mxu0 %v1580
    %v1582 = vpop.f32.mrf.mxu0
    %v1583 = vadd.f32 %v1343, %v1582
    %v1584 = vand.u32 %v1109, 4294901760
    %1585 = vmatmul.f32.gmra.mxu0 %v1584
    %v1586 = vpop.f32.mrf.mxu0
    %v1587 = vadd.f32 %v1351, %v1586
    %v1588 = vand.u32 %v1112, 4294901760
    %1589 = vmatmul.f32.gmra.mxu0 %v1588
    %v1590 = vpop.f32.mrf.mxu0
    %v1591 = vadd.f32 %v1359, %v1590
    %v1592 = vand.u32 %v1115, 4294901760
    %1593 = vmatmul.f32.gmra.mxu0 %v1592
    %v1594 = vpop.f32.mrf.mxu0
    %v1595 = vadd.f32 %v1367, %v1594
    %v1596 = vand.u32 %v1118, 4294901760
    %1597 = vmatmul.f32.gmra.mxu0 %v1596
    %v1598 = vpop.f32.mrf.mxu0
    %v1599 = vadd.f32 %v1375, %v1598
    %v1600 = vand.u32 %v1121, 4294901760
    %1601 = vmatmul.f32.gmra.mxu0 %v1600
    %v1602 = vpop.f32.mrf.mxu0
    %v1603 = vadd.f32 %v1383, %v1602
    %v1604 = vand.u32 %v1124, 4294901760
    %1605 = vmatmul.f32.gmra.mxu0 %v1604
    %v1606 = vpop.f32.mrf.mxu0
    %v1607 = vadd.f32 %v1391, %v1606
    %v1608 = vand.u32 %v1127, 4294901760
    %1609 = vmatmul.f32.gmra.mxu0 %v1608
    %v1610 = vpop.f32.mrf.mxu0
    %v1611 = vadd.f32 %v1399, %v1610
    %1612 = vdwg.mxu0
    %1613 = vmatpush.msra.mxu0 0.0
    %v1614 = vand.u32 %v827, 4294901760
    %v1615 = vsub.f32 %v827, %v1614
    %1616 = vmatpush.msra.mxu0 %v1615
    %v1617 = vand.u32 %v826, 4294901760
    %v1618 = vsub.f32 %v826, %v1617
    %1619 = vmatpush.msra.mxu0 %v1618
    %v1620 = vand.u32 %v825, 4294901760
    %v1621 = vsub.f32 %v825, %v1620
    %1622 = vmatpush.msra.mxu0 %v1621
    %v1623 = vand.u32 %v824, 4294901760
    %v1624 = vsub.f32 %v824, %v1623
    %1625 = vmatpush.msra.mxu0 %v1624
    %v1626 = vand.u32 %v823, 4294901760
    %v1627 = vsub.f32 %v823, %v1626
    %1628 = vmatpush.msra.mxu0 %v1627
    %v1629 = vand.u32 %v822, 4294901760
    %v1630 = vsub.f32 %v822, %v1629
    %1631 = vmatpush.msra.mxu0 %v1630
    %v1632 = vand.u32 %v821, 4294901760
    %v1633 = vsub.f32 %v821, %v1632
    %1634 = vmatpush.msra.mxu0 %v1633
    %v1635 = vand.u32 %v820, 4294901760
    %v1636 = vsub.f32 %v820, %v1635
    %1637 = vmatpush.msra.mxu0 %v1636
    %v1638 = vand.u32 %v819, 4294901760
    %v1639 = vsub.f32 %v819, %v1638
    %1640 = vmatpush.msra.mxu0 %v1639
    %v1641 = vand.u32 %v818, 4294901760
    %v1642 = vsub.f32 %v818, %v1641
    %1643 = vmatpush.msra.mxu0 %v1642
    %v1644 = vand.u32 %v817, 4294901760
    %v1645 = vsub.f32 %v817, %v1644
    %1646 = vmatpush.msra.mxu0 %v1645
    %v1647 = vand.u32 %v816, 4294901760
    %v1648 = vsub.f32 %v816, %v1647
    %1649 = vmatpush.msra.mxu0 %v1648
    %v1650 = vand.u32 %v815, 4294901760
    %v1651 = vsub.f32 %v815, %v1650
    %1652 = vmatpush.msra.mxu0 %v1651
    %v1653 = vand.u32 %v814, 4294901760
    %v1654 = vsub.f32 %v814, %v1653
    %1655 = vmatpush.msra.mxu0 %v1654
    %v1656 = vand.u32 %v813, 4294901760
    %v1657 = vsub.f32 %v813, %v1656
    %1658 = vmatpush.msra.mxu0 %v1657
    %v1659 = vand.u32 %v1040, 4294901760
    %v1660 = vsub.f32 %v1040, %v1659
    %1661 = vmatmul.f32.gmra.mxu0 %v1660
    %v1662 = vpop.f32.mrf.mxu0
    %v1663 = vadd.f32 %v1495, %v1662
    %v1664 = vand.u32 %v1043, 4294901760
    %v1665 = vsub.f32 %v1043, %v1664
    %1666 = vmatmul.f32.gmra.mxu0 %v1665
    %v1667 = vpop.f32.mrf.mxu0
    %v1668 = vadd.f32 %v1499, %v1667
    %v1669 = vand.u32 %v1046, 4294901760
    %v1670 = vsub.f32 %v1046, %v1669
    %1671 = vmatmul.f32.gmra.mxu0 %v1670
    %v1672 = vpop.f32.mrf.mxu0
    %v1673 = vadd.f32 %v1503, %v1672
    %v1674 = vand.u32 %v1049, 4294901760
    %v1675 = vsub.f32 %v1049, %v1674
    %1676 = vmatmul.f32.gmra.mxu0 %v1675
    %v1677 = vpop.f32.mrf.mxu0
    %v1678 = vadd.f32 %v1507, %v1677
    %v1679 = vand.u32 %v1052, 4294901760
    %v1680 = vsub.f32 %v1052, %v1679
    %1681 = vmatmul.f32.gmra.mxu0 %v1680
    %v1682 = vpop.f32.mrf.mxu0
    %v1683 = vadd.f32 %v1511, %v1682
    %v1684 = vand.u32 %v1055, 4294901760
    %v1685 = vsub.f32 %v1055, %v1684
    %1686 = vmatmul.f32.gmra.mxu0 %v1685
    %v1687 = vpop.f32.mrf.mxu0
    %v1688 = vadd.f32 %v1515, %v1687
    %v1689 = vand.u32 %v1058, 4294901760
    %v1690 = vsub.f32 %v1058, %v1689
    %1691 = vmatmul.f32.gmra.mxu0 %v1690
    %v1692 = vpop.f32.mrf.mxu0
    %v1693 = vadd.f32 %v1519, %v1692
    %v1694 = vand.u32 %v1061, 4294901760
    %v1695 = vsub.f32 %v1061, %v1694
    %1696 = vmatmul.f32.gmra.mxu0 %v1695
    %v1697 = vpop.f32.mrf.mxu0
    %v1698 = vadd.f32 %v1523, %v1697
    %v1699 = vand.u32 %v1064, 4294901760
    %v1700 = vsub.f32 %v1064, %v1699
    %1701 = vmatmul.f32.gmra.mxu0 %v1700
    %v1702 = vpop.f32.mrf.mxu0
    %v1703 = vadd.f32 %v1527, %v1702
    %v1704 = vand.u32 %v1067, 4294901760
    %v1705 = vsub.f32 %v1067, %v1704
    %1706 = vmatmul.f32.gmra.mxu0 %v1705
    %v1707 = vpop.f32.mrf.mxu0
    %v1708 = vadd.f32 %v1531, %v1707
    %v1709 = vand.u32 %v1070, 4294901760
    %v1710 = vsub.f32 %v1070, %v1709
    %1711 = vmatmul.f32.gmra.mxu0 %v1710
    %v1712 = vpop.f32.mrf.mxu0
    %v1713 = vadd.f32 %v1535, %v1712
    %v1714 = vand.u32 %v1073, 4294901760
    %v1715 = vsub.f32 %v1073, %v1714
    %1716 = vmatmul.f32.gmra.mxu0 %v1715
    %v1717 = vpop.f32.mrf.mxu0
    %v1718 = vadd.f32 %v1539, %v1717
    %v1719 = vand.u32 %v1076, 4294901760
    %v1720 = vsub.f32 %v1076, %v1719
    %1721 = vmatmul.f32.gmra.mxu0 %v1720
    %v1722 = vpop.f32.mrf.mxu0
    %v1723 = vadd.f32 %v1543, %v1722
    %v1724 = vand.u32 %v1079, 4294901760
    %v1725 = vsub.f32 %v1079, %v1724
    %1726 = vmatmul.f32.gmra.mxu0 %v1725
    %v1727 = vpop.f32.mrf.mxu0
    %v1728 = vadd.f32 %v1547, %v1727
    %v1729 = vand.u32 %v1082, 4294901760
    %v1730 = vsub.f32 %v1082, %v1729
    %1731 = vmatmul.f32.gmra.mxu0 %v1730
    %v1732 = vpop.f32.mrf.mxu0
    %v1733 = vadd.f32 %v1551, %v1732
    %v1734 = vand.u32 %v1085, 4294901760
    %v1735 = vsub.f32 %v1085, %v1734
    %1736 = vmatmul.f32.gmra.mxu0 %v1735
    %v1737 = vpop.f32.mrf.mxu0
    %v1738 = vadd.f32 %v1555, %v1737
    %v1739 = vand.u32 %v1088, 4294901760
    %v1740 = vsub.f32 %v1088, %v1739
    %1741 = vmatmul.f32.gmra.mxu0 %v1740
    %v1742 = vpop.f32.mrf.mxu0
    %v1743 = vadd.f32 %v1559, %v1742
    %v1744 = vand.u32 %v1091, 4294901760
    %v1745 = vsub.f32 %v1091, %v1744
    %1746 = vmatmul.f32.gmra.mxu0 %v1745
    %v1747 = vpop.f32.mrf.mxu0
    %v1748 = vadd.f32 %v1563, %v1747
    %v1749 = vand.u32 %v1094, 4294901760
    %v1750 = vsub.f32 %v1094, %v1749
    %1751 = vmatmul.f32.gmra.mxu0 %v1750
    %v1752 = vpop.f32.mrf.mxu0
    %v1753 = vadd.f32 %v1567, %v1752
    %v1754 = vand.u32 %v1097, 4294901760
    %v1755 = vsub.f32 %v1097, %v1754
    %1756 = vmatmul.f32.gmra.mxu0 %v1755
    %v1757 = vpop.f32.mrf.mxu0
    %v1758 = vadd.f32 %v1571, %v1757
    %v1759 = vand.u32 %v1100, 4294901760
    %v1760 = vsub.f32 %v1100, %v1759
    %1761 = vmatmul.f32.gmra.mxu0 %v1760
    %v1762 = vpop.f32.mrf.mxu0
    %v1763 = vadd.f32 %v1575, %v1762
    %v1764 = vand.u32 %v1103, 4294901760
    %v1765 = vsub.f32 %v1103, %v1764
    %1766 = vmatmul.f32.gmra.mxu0 %v1765
    %v1767 = vpop.f32.mrf.mxu0
    %v1768 = vadd.f32 %v1579, %v1767
    %v1769 = vand.u32 %v1106, 4294901760
    %v1770 = vsub.f32 %v1106, %v1769
    %1771 = vmatmul.f32.gmra.mxu0 %v1770
    %v1772 = vpop.f32.mrf.mxu0
    %v1773 = vadd.f32 %v1583, %v1772
    %v1774 = vand.u32 %v1109, 4294901760
    %v1775 = vsub.f32 %v1109, %v1774
    %1776 = vmatmul.f32.gmra.mxu0 %v1775
    %v1777 = vpop.f32.mrf.mxu0
    %v1778 = vadd.f32 %v1587, %v1777
    %v1779 = vand.u32 %v1112, 4294901760
    %v1780 = vsub.f32 %v1112, %v1779
    %1781 = vmatmul.f32.gmra.mxu0 %v1780
    %v1782 = vpop.f32.mrf.mxu0
    %v1783 = vadd.f32 %v1591, %v1782
    %v1784 = vand.u32 %v1115, 4294901760
    %v1785 = vsub.f32 %v1115, %v1784
    %1786 = vmatmul.f32.gmra.mxu0 %v1785
    %v1787 = vpop.f32.mrf.mxu0
    %v1788 = vadd.f32 %v1595, %v1787
    %v1789 = vand.u32 %v1118, 4294901760
    %v1790 = vsub.f32 %v1118, %v1789
    %1791 = vmatmul.f32.gmra.mxu0 %v1790
    %v1792 = vpop.f32.mrf.mxu0
    %v1793 = vadd.f32 %v1599, %v1792
    %v1794 = vand.u32 %v1121, 4294901760
    %v1795 = vsub.f32 %v1121, %v1794
    %1796 = vmatmul.f32.gmra.mxu0 %v1795
    %v1797 = vpop.f32.mrf.mxu0
    %v1798 = vadd.f32 %v1603, %v1797
    %v1799 = vand.u32 %v1124, 4294901760
    %v1800 = vsub.f32 %v1124, %v1799
    %1801 = vmatmul.f32.gmra.mxu0 %v1800
    %v1802 = vpop.f32.mrf.mxu0
    %v1803 = vadd.f32 %v1607, %v1802
    %v1804 = vand.u32 %v1127, 4294901760
    %v1805 = vsub.f32 %v1127, %v1804
    %1806 = vmatmul.f32.gmra.mxu0 %v1805
    %v1807 = vpop.f32.mrf.mxu0
    %v1808 = vadd.f32 %v1611, %v1807
    %1809 = vdwg.mxu0
    %1810 = vmatpush.msra.mxu0 0.0
    %v1811 = vand.u32 %v827, 4294901760
    %1812 = vmatpush.msra.mxu0 %v1811
    %v1813 = vand.u32 %v826, 4294901760
    %1814 = vmatpush.msra.mxu0 %v1813
    %v1815 = vand.u32 %v825, 4294901760
    %1816 = vmatpush.msra.mxu0 %v1815
    %v1817 = vand.u32 %v824, 4294901760
    %1818 = vmatpush.msra.mxu0 %v1817
    %v1819 = vand.u32 %v823, 4294901760
    %1820 = vmatpush.msra.mxu0 %v1819
    %v1821 = vand.u32 %v822, 4294901760
    %1822 = vmatpush.msra.mxu0 %v1821
    %v1823 = vand.u32 %v821, 4294901760
    %1824 = vmatpush.msra.mxu0 %v1823
    %v1825 = vand.u32 %v820, 4294901760
    %1826 = vmatpush.msra.mxu0 %v1825
    %v1827 = vand.u32 %v819, 4294901760
    %1828 = vmatpush.msra.mxu0 %v1827
    %v1829 = vand.u32 %v818, 4294901760
    %1830 = vmatpush.msra.mxu0 %v1829
    %v1831 = vand.u32 %v817, 4294901760
    %1832 = vmatpush.msra.mxu0 %v1831
    %v1833 = vand.u32 %v816, 4294901760
    %1834 = vmatpush.msra.mxu0 %v1833
    %v1835 = vand.u32 %v815, 4294901760
    %1836 = vmatpush.msra.mxu0 %v1835
    %v1837 = vand.u32 %v814, 4294901760
    %1838 = vmatpush.msra.mxu0 %v1837
    %v1839 = vand.u32 %v813, 4294901760
    %1840 = vmatpush.msra.mxu0 %v1839
    %v1841 = vand.u32 %v1040, 4294901760
    %v1842 = vsub.f32 %v1040, %v1841
    %v1843 = vand.u32 %v1842, 4294901760
    %1844 = vmatmul.f32.gmra.mxu0 %v1843
    %v1845 = vpop.f32.mrf.mxu0
    %v1846 = vadd.f32 %v1663, %v1845
    %v1847 = vand.u32 %v1043, 4294901760
    %v1848 = vsub.f32 %v1043, %v1847
    %v1849 = vand.u32 %v1848, 4294901760
    %1850 = vmatmul.f32.gmra.mxu0 %v1849
    %v1851 = vpop.f32.mrf.mxu0
    %v1852 = vadd.f32 %v1668, %v1851
    %v1853 = vand.u32 %v1046, 4294901760
    %v1854 = vsub.f32 %v1046, %v1853
    %v1855 = vand.u32 %v1854, 4294901760
    %1856 = vmatmul.f32.gmra.mxu0 %v1855
    %v1857 = vpop.f32.mrf.mxu0
    %v1858 = vadd.f32 %v1673, %v1857
    %v1859 = vand.u32 %v1049, 4294901760
    %v1860 = vsub.f32 %v1049, %v1859
    %v1861 = vand.u32 %v1860, 4294901760
    %1862 = vmatmul.f32.gmra.mxu0 %v1861
    %v1863 = vpop.f32.mrf.mxu0
    %v1864 = vadd.f32 %v1678, %v1863
    %v1865 = vand.u32 %v1052, 4294901760
    %v1866 = vsub.f32 %v1052, %v1865
    %v1867 = vand.u32 %v1866, 4294901760
    %1868 = vmatmul.f32.gmra.mxu0 %v1867
    %v1869 = vpop.f32.mrf.mxu0
    %v1870 = vadd.f32 %v1683, %v1869
    %v1871 = vand.u32 %v1055, 4294901760
    %v1872 = vsub.f32 %v1055, %v1871
    %v1873 = vand.u32 %v1872, 4294901760
    %1874 = vmatmul.f32.gmra.mxu0 %v1873
    %v1875 = vpop.f32.mrf.mxu0
    %v1876 = vadd.f32 %v1688, %v1875
    %v1877 = vand.u32 %v1058, 4294901760
    %v1878 = vsub.f32 %v1058, %v1877
    %v1879 = vand.u32 %v1878, 4294901760
    %1880 = vmatmul.f32.gmra.mxu0 %v1879
    %v1881 = vpop.f32.mrf.mxu0
    %v1882 = vadd.f32 %v1693, %v1881
    %v1883 = vand.u32 %v1061, 4294901760
    %v1884 = vsub.f32 %v1061, %v1883
    %v1885 = vand.u32 %v1884, 4294901760
    %1886 = vmatmul.f32.gmra.mxu0 %v1885
    %v1887 = vpop.f32.mrf.mxu0
    %v1888 = vadd.f32 %v1698, %v1887
    %v1889 = vand.u32 %v1064, 4294901760
    %v1890 = vsub.f32 %v1064, %v1889
    %v1891 = vand.u32 %v1890, 4294901760
    %1892 = vmatmul.f32.gmra.mxu0 %v1891
    %v1893 = vpop.f32.mrf.mxu0
    %v1894 = vadd.f32 %v1703, %v1893
    %v1895 = vand.u32 %v1067, 4294901760
    %v1896 = vsub.f32 %v1067, %v1895
    %v1897 = vand.u32 %v1896, 4294901760
    %1898 = vmatmul.f32.gmra.mxu0 %v1897
    %v1899 = vpop.f32.mrf.mxu0
    %v1900 = vadd.f32 %v1708, %v1899
    %v1901 = vand.u32 %v1070, 4294901760
    %v1902 = vsub.f32 %v1070, %v1901
    %v1903 = vand.u32 %v1902, 4294901760
    %1904 = vmatmul.f32.gmra.mxu0 %v1903
    %v1905 = vpop.f32.mrf.mxu0
    %v1906 = vadd.f32 %v1713, %v1905
    %v1907 = vand.u32 %v1073, 4294901760
    %v1908 = vsub.f32 %v1073, %v1907
    %v1909 = vand.u32 %v1908, 4294901760
    %1910 = vmatmul.f32.gmra.mxu0 %v1909
    %v1911 = vpop.f32.mrf.mxu0
    %v1912 = vadd.f32 %v1718, %v1911
    %v1913 = vand.u32 %v1076, 4294901760
    %v1914 = vsub.f32 %v1076, %v1913
    %v1915 = vand.u32 %v1914, 4294901760
    %1916 = vmatmul.f32.gmra.mxu0 %v1915
    %v1917 = vpop.f32.mrf.mxu0
    %v1918 = vadd.f32 %v1723, %v1917
    %v1919 = vand.u32 %v1079, 4294901760
    %v1920 = vsub.f32 %v1079, %v1919
    %v1921 = vand.u32 %v1920, 4294901760
    %1922 = vmatmul.f32.gmra.mxu0 %v1921
    %v1923 = vpop.f32.mrf.mxu0
    %v1924 = vadd.f32 %v1728, %v1923
    %v1925 = vand.u32 %v1082, 4294901760
    %v1926 = vsub.f32 %v1082, %v1925
    %v1927 = vand.u32 %v1926, 4294901760
    %1928 = vmatmul.f32.gmra.mxu0 %v1927
    %v1929 = vpop.f32.mrf.mxu0
    %v1930 = vadd.f32 %v1733, %v1929
    %v1931 = vand.u32 %v1085, 4294901760
    %v1932 = vsub.f32 %v1085, %v1931
    %v1933 = vand.u32 %v1932, 4294901760
    %1934 = vmatmul.f32.gmra.mxu0 %v1933
    %v1935 = vpop.f32.mrf.mxu0
    %v1936 = vadd.f32 %v1738, %v1935
    %v1937 = vand.u32 %v1088, 4294901760
    %v1938 = vsub.f32 %v1088, %v1937
    %v1939 = vand.u32 %v1938, 4294901760
    %1940 = vmatmul.f32.gmra.mxu0 %v1939
    %v1941 = vpop.f32.mrf.mxu0
    %v1942 = vadd.f32 %v1743, %v1941
    %v1943 = vand.u32 %v1091, 4294901760
    %v1944 = vsub.f32 %v1091, %v1943
    %v1945 = vand.u32 %v1944, 4294901760
    %1946 = vmatmul.f32.gmra.mxu0 %v1945
    %v1947 = vpop.f32.mrf.mxu0
    %v1948 = vadd.f32 %v1748, %v1947
    %v1949 = vand.u32 %v1094, 4294901760
    %v1950 = vsub.f32 %v1094, %v1949
    %v1951 = vand.u32 %v1950, 4294901760
    %1952 = vmatmul.f32.gmra.mxu0 %v1951
    %v1953 = vpop.f32.mrf.mxu0
    %v1954 = vadd.f32 %v1753, %v1953
    %v1955 = vand.u32 %v1097, 4294901760
    %v1956 = vsub.f32 %v1097, %v1955
    %v1957 = vand.u32 %v1956, 4294901760
    %1958 = vmatmul.f32.gmra.mxu0 %v1957
    %v1959 = vpop.f32.mrf.mxu0
    %v1960 = vadd.f32 %v1758, %v1959
    %v1961 = vand.u32 %v1100, 4294901760
    %v1962 = vsub.f32 %v1100, %v1961
    %v1963 = vand.u32 %v1962, 4294901760
    %1964 = vmatmul.f32.gmra.mxu0 %v1963
    %v1965 = vpop.f32.mrf.mxu0
    %v1966 = vadd.f32 %v1763, %v1965
    %v1967 = vand.u32 %v1103, 4294901760
    %v1968 = vsub.f32 %v1103, %v1967
    %v1969 = vand.u32 %v1968, 4294901760
    %1970 = vmatmul.f32.gmra.mxu0 %v1969
    %v1971 = vpop.f32.mrf.mxu0
    %v1972 = vadd.f32 %v1768, %v1971
    %v1973 = vand.u32 %v1106, 4294901760
    %v1974 = vsub.f32 %v1106, %v1973
    %v1975 = vand.u32 %v1974, 4294901760
    %1976 = vmatmul.f32.gmra.mxu0 %v1975
    %v1977 = vpop.f32.mrf.mxu0
    %v1978 = vadd.f32 %v1773, %v1977
    %v1979 = vand.u32 %v1109, 4294901760
    %v1980 = vsub.f32 %v1109, %v1979
    %v1981 = vand.u32 %v1980, 4294901760
    %1982 = vmatmul.f32.gmra.mxu0 %v1981
    %v1983 = vpop.f32.mrf.mxu0
    %v1984 = vadd.f32 %v1778, %v1983
    %v1985 = vand.u32 %v1112, 4294901760
    %v1986 = vsub.f32 %v1112, %v1985
    %v1987 = vand.u32 %v1986, 4294901760
    %1988 = vmatmul.f32.gmra.mxu0 %v1987
    %v1989 = vpop.f32.mrf.mxu0
    %v1990 = vadd.f32 %v1783, %v1989
    %v1991 = vand.u32 %v1115, 4294901760
    %v1992 = vsub.f32 %v1115, %v1991
    %v1993 = vand.u32 %v1992, 4294901760
    %1994 = vmatmul.f32.gmra.mxu0 %v1993
    %v1995 = vpop.f32.mrf.mxu0
    %v1996 = vadd.f32 %v1788, %v1995
    %v1997 = vand.u32 %v1118, 4294901760
    %v1998 = vsub.f32 %v1118, %v1997
    %v1999 = vand.u32 %v1998, 4294901760
    %2000 = vmatmul.f32.gmra.mxu0 %v1999
    %v2001 = vpop.f32.mrf.mxu0
    %v2002 = vadd.f32 %v1793, %v2001
    %v2003 = vand.u32 %v1121, 4294901760
    %v2004 = vsub.f32 %v1121, %v2003
    %v2005 = vand.u32 %v2004, 4294901760
    %2006 = vmatmul.f32.gmra.mxu0 %v2005
    %v2007 = vpop.f32.mrf.mxu0
    %v2008 = vadd.f32 %v1798, %v2007
    %v2009 = vand.u32 %v1124, 4294901760
    %v2010 = vsub.f32 %v1124, %v2009
    %v2011 = vand.u32 %v2010, 4294901760
    %2012 = vmatmul.f32.gmra.mxu0 %v2011
    %v2013 = vpop.f32.mrf.mxu0
    %v2014 = vadd.f32 %v1803, %v2013
    %v2015 = vand.u32 %v1127, 4294901760
    %v2016 = vsub.f32 %v1127, %v2015
    %v2017 = vand.u32 %v2016, 4294901760
    %2018 = vmatmul.f32.gmra.mxu0 %v2017
    %v2019 = vpop.f32.mrf.mxu0
    %v2020 = vadd.f32 %v1808, %v2019
    %2021 = vdwg.mxu0
    %2022 = vmatpush.msra.mxu0 0.0
    %v2023 = vand.u32 %v827, 4294901760
    %v2024 = vsub.f32 %v827, %v2023
    %v2025 = vand.u32 %v2024, 4294901760
    %2026 = vmatpush.msra.mxu0 %v2025
    %v2027 = vand.u32 %v826, 4294901760
    %v2028 = vsub.f32 %v826, %v2027
    %v2029 = vand.u32 %v2028, 4294901760
    %2030 = vmatpush.msra.mxu0 %v2029
    %v2031 = vand.u32 %v825, 4294901760
    %v2032 = vsub.f32 %v825, %v2031
    %v2033 = vand.u32 %v2032, 4294901760
    %2034 = vmatpush.msra.mxu0 %v2033
    %v2035 = vand.u32 %v824, 4294901760
    %v2036 = vsub.f32 %v824, %v2035
    %v2037 = vand.u32 %v2036, 4294901760
    %2038 = vmatpush.msra.mxu0 %v2037
    %v2039 = vand.u32 %v823, 4294901760
    %v2040 = vsub.f32 %v823, %v2039
    %v2041 = vand.u32 %v2040, 4294901760
    %2042 = vmatpush.msra.mxu0 %v2041
    %v2043 = vand.u32 %v822, 4294901760
    %v2044 = vsub.f32 %v822, %v2043
    %v2045 = vand.u32 %v2044, 4294901760
    %2046 = vmatpush.msra.mxu0 %v2045
    %v2047 = vand.u32 %v821, 4294901760
    %v2048 = vsub.f32 %v821, %v2047
    %v2049 = vand.u32 %v2048, 4294901760
    %2050 = vmatpush.msra.mxu0 %v2049
    %v2051 = vand.u32 %v820, 4294901760
    %v2052 = vsub.f32 %v820, %v2051
    %v2053 = vand.u32 %v2052, 4294901760
    %2054 = vmatpush.msra.mxu0 %v2053
    %v2055 = vand.u32 %v819, 4294901760
    %v2056 = vsub.f32 %v819, %v2055
    %v2057 = vand.u32 %v2056, 4294901760
    %2058 = vmatpush.msra.mxu0 %v2057
    %v2059 = vand.u32 %v818, 4294901760
    %v2060 = vsub.f32 %v818, %v2059
    %v2061 = vand.u32 %v2060, 4294901760
    %2062 = vmatpush.msra.mxu0 %v2061
    %v2063 = vand.u32 %v817, 4294901760
    %v2064 = vsub.f32 %v817, %v2063
    %v2065 = vand.u32 %v2064, 4294901760
    %2066 = vmatpush.msra.mxu0 %v2065
    %v2067 = vand.u32 %v816, 4294901760
    %v2068 = vsub.f32 %v816, %v2067
    %v2069 = vand.u32 %v2068, 4294901760
    %2070 = vmatpush.msra.mxu0 %v2069
    %v2071 = vand.u32 %v815, 4294901760
    %v2072 = vsub.f32 %v815, %v2071
    %v2073 = vand.u32 %v2072, 4294901760
    %2074 = vmatpush.msra.mxu0 %v2073
    %v2075 = vand.u32 %v814, 4294901760
    %v2076 = vsub.f32 %v814, %v2075
    %v2077 = vand.u32 %v2076, 4294901760
    %2078 = vmatpush.msra.mxu0 %v2077
    %v2079 = vand.u32 %v813, 4294901760
    %v2080 = vsub.f32 %v813, %v2079
    %v2081 = vand.u32 %v2080, 4294901760
    %2082 = vmatpush.msra.mxu0 %v2081
    %v2083 = vand.u32 %v1040, 4294901760
    %2084 = vmatmul.f32.gmra.mxu0 %v2083
    %v2085 = vpop.f32.mrf.mxu0
    %v2086 = vadd.f32 %v1846, %v2085
    %v2087 = vand.u32 %v1043, 4294901760
    %2088 = vmatmul.f32.gmra.mxu0 %v2087
    %v2089 = vpop.f32.mrf.mxu0
    %v2090 = vadd.f32 %v1852, %v2089
    %v2091 = vand.u32 %v1046, 4294901760
    %2092 = vmatmul.f32.gmra.mxu0 %v2091
    %v2093 = vpop.f32.mrf.mxu0
    %v2094 = vadd.f32 %v1858, %v2093
    %v2095 = vand.u32 %v1049, 4294901760
    %2096 = vmatmul.f32.gmra.mxu0 %v2095
    %v2097 = vpop.f32.mrf.mxu0
    %v2098 = vadd.f32 %v1864, %v2097
    %v2099 = vand.u32 %v1052, 4294901760
    %2100 = vmatmul.f32.gmra.mxu0 %v2099
    %v2101 = vpop.f32.mrf.mxu0
    %v2102 = vadd.f32 %v1870, %v2101
    %v2103 = vand.u32 %v1055, 4294901760
    %2104 = vmatmul.f32.gmra.mxu0 %v2103
    %v2105 = vpop.f32.mrf.mxu0
    %v2106 = vadd.f32 %v1876, %v2105
    %v2107 = vand.u32 %v1058, 4294901760
    %2108 = vmatmul.f32.gmra.mxu0 %v2107
    %v2109 = vpop.f32.mrf.mxu0
    %v2110 = vadd.f32 %v1882, %v2109
    %v2111 = vand.u32 %v1061, 4294901760
    %2112 = vmatmul.f32.gmra.mxu0 %v2111
    %v2113 = vpop.f32.mrf.mxu0
    %v2114 = vadd.f32 %v1888, %v2113
    %v2115 = vand.u32 %v1064, 4294901760
    %2116 = vmatmul.f32.gmra.mxu0 %v2115
    %v2117 = vpop.f32.mrf.mxu0
    %v2118 = vadd.f32 %v1894, %v2117
    %v2119 = vand.u32 %v1067, 4294901760
    %2120 = vmatmul.f32.gmra.mxu0 %v2119
    %v2121 = vpop.f32.mrf.mxu0
    %v2122 = vadd.f32 %v1900, %v2121
    %v2123 = vand.u32 %v1070, 4294901760
    %2124 = vmatmul.f32.gmra.mxu0 %v2123
    %v2125 = vpop.f32.mrf.mxu0
    %v2126 = vadd.f32 %v1906, %v2125
    %v2127 = vand.u32 %v1073, 4294901760
    %2128 = vmatmul.f32.gmra.mxu0 %v2127
    %v2129 = vpop.f32.mrf.mxu0
    %v2130 = vadd.f32 %v1912, %v2129
    %v2131 = vand.u32 %v1076, 4294901760
    %2132 = vmatmul.f32.gmra.mxu0 %v2131
    %v2133 = vpop.f32.mrf.mxu0
    %v2134 = vadd.f32 %v1918, %v2133
    %v2135 = vand.u32 %v1079, 4294901760
    %2136 = vmatmul.f32.gmra.mxu0 %v2135
    %v2137 = vpop.f32.mrf.mxu0
    %v2138 = vadd.f32 %v1924, %v2137
    %v2139 = vand.u32 %v1082, 4294901760
    %2140 = vmatmul.f32.gmra.mxu0 %v2139
    %v2141 = vpop.f32.mrf.mxu0
    %v2142 = vadd.f32 %v1930, %v2141
    %v2143 = vand.u32 %v1085, 4294901760
    %2144 = vmatmul.f32.gmra.mxu0 %v2143
    %v2145 = vpop.f32.mrf.mxu0
    %v2146 = vadd.f32 %v1936, %v2145
    %v2147 = vand.u32 %v1088, 4294901760
    %2148 = vmatmul.f32.gmra.mxu0 %v2147
    %v2149 = vpop.f32.mrf.mxu0
    %v2150 = vadd.f32 %v1942, %v2149
    %v2151 = vand.u32 %v1091, 4294901760
    %2152 = vmatmul.f32.gmra.mxu0 %v2151
    %v2153 = vpop.f32.mrf.mxu0
    %v2154 = vadd.f32 %v1948, %v2153
    %v2155 = vand.u32 %v1094, 4294901760
    %2156 = vmatmul.f32.gmra.mxu0 %v2155
    %v2157 = vpop.f32.mrf.mxu0
    %v2158 = vadd.f32 %v1954, %v2157
    %v2159 = vand.u32 %v1097, 4294901760
    %2160 = vmatmul.f32.gmra.mxu0 %v2159
    %v2161 = vpop.f32.mrf.mxu0
    %v2162 = vadd.f32 %v1960, %v2161
    %v2163 = vand.u32 %v1100, 4294901760
    %2164 = vmatmul.f32.gmra.mxu0 %v2163
    %v2165 = vpop.f32.mrf.mxu0
    %v2166 = vadd.f32 %v1966, %v2165
    %v2167 = vand.u32 %v1103, 4294901760
    %2168 = vmatmul.f32.gmra.mxu0 %v2167
    %v2169 = vpop.f32.mrf.mxu0
    %v2170 = vadd.f32 %v1972, %v2169
    %v2171 = vand.u32 %v1106, 4294901760
    %2172 = vmatmul.f32.gmra.mxu0 %v2171
    %v2173 = vpop.f32.mrf.mxu0
    %v2174 = vadd.f32 %v1978, %v2173
    %v2175 = vand.u32 %v1109, 4294901760
    %2176 = vmatmul.f32.gmra.mxu0 %v2175
    %v2177 = vpop.f32.mrf.mxu0
    %v2178 = vadd.f32 %v1984, %v2177
    %v2179 = vand.u32 %v1112, 4294901760
    %2180 = vmatmul.f32.gmra.mxu0 %v2179
    %v2181 = vpop.f32.mrf.mxu0
    %v2182 = vadd.f32 %v1990, %v2181
    %v2183 = vand.u32 %v1115, 4294901760
    %2184 = vmatmul.f32.gmra.mxu0 %v2183
    %v2185 = vpop.f32.mrf.mxu0
    %v2186 = vadd.f32 %v1996, %v2185
    %v2187 = vand.u32 %v1118, 4294901760
    %2188 = vmatmul.f32.gmra.mxu0 %v2187
    %v2189 = vpop.f32.mrf.mxu0
    %v2190 = vadd.f32 %v2002, %v2189
    %v2191 = vand.u32 %v1121, 4294901760
    %2192 = vmatmul.f32.gmra.mxu0 %v2191
    %v2193 = vpop.f32.mrf.mxu0
    %v2194 = vadd.f32 %v2008, %v2193
    %v2195 = vand.u32 %v1124, 4294901760
    %2196 = vmatmul.f32.gmra.mxu0 %v2195
    %v2197 = vpop.f32.mrf.mxu0
    %v2198 = vadd.f32 %v2014, %v2197
    %v2199 = vand.u32 %v1127, 4294901760
    %2200 = vmatmul.f32.gmra.mxu0 %v2199
    %v2201 = vpop.f32.mrf.mxu0
    %v2202 = vadd.f32 %v2020, %v2201
    %2203 = vdwg.mxu0
    %2204 = vmatpush.msra.mxu0 0.0
    %v2205 = vand.u32 %v827, 4294901760
    %2206 = vmatpush.msra.mxu0 %v2205
    %v2207 = vand.u32 %v826, 4294901760
    %2208 = vmatpush.msra.mxu0 %v2207
    %v2209 = vand.u32 %v825, 4294901760
    %2210 = vmatpush.msra.mxu0 %v2209
    %v2211 = vand.u32 %v824, 4294901760
    %2212 = vmatpush.msra.mxu0 %v2211
    %v2213 = vand.u32 %v823, 4294901760
    %2214 = vmatpush.msra.mxu0 %v2213
    %v2215 = vand.u32 %v822, 4294901760
    %2216 = vmatpush.msra.mxu0 %v2215
    %v2217 = vand.u32 %v821, 4294901760
    %2218 = vmatpush.msra.mxu0 %v2217
    %v2219 = vand.u32 %v820, 4294901760
    %2220 = vmatpush.msra.mxu0 %v2219
    %v2221 = vand.u32 %v819, 4294901760
    %2222 = vmatpush.msra.mxu0 %v2221
    %v2223 = vand.u32 %v818, 4294901760
    %2224 = vmatpush.msra.mxu0 %v2223
    %v2225 = vand.u32 %v817, 4294901760
    %2226 = vmatpush.msra.mxu0 %v2225
    %v2227 = vand.u32 %v816, 4294901760
    %2228 = vmatpush.msra.mxu0 %v2227
    %v2229 = vand.u32 %v815, 4294901760
    %2230 = vmatpush.msra.mxu0 %v2229
    %v2231 = vand.u32 %v814, 4294901760
    %2232 = vmatpush.msra.mxu0 %v2231
    %v2233 = vand.u32 %v813, 4294901760
    %2234 = vmatpush.msra.mxu0 %v2233
    %v2235 = vand.u32 %v1040, 4294901760
    %2236 = vmatmul.f32.gmra.mxu0 %v2235
    %v2237 = vpop.f32.mrf.mxu0
    %v2238 = vadd.f32 %v2086, %v2237
    %v2239 = vand.u32 %v1043, 4294901760
    %2240 = vmatmul.f32.gmra.mxu0 %v2239
    %v2241 = vpop.f32.mrf.mxu0
    %v2242 = vadd.f32 %v2090, %v2241
    %v2243 = vand.u32 %v1046, 4294901760
    %2244 = vmatmul.f32.gmra.mxu0 %v2243
    %v2245 = vpop.f32.mrf.mxu0
    %v2246 = vadd.f32 %v2094, %v2245
    %v2247 = vand.u32 %v1049, 4294901760
    %2248 = vmatmul.f32.gmra.mxu0 %v2247
    %v2249 = vpop.f32.mrf.mxu0
    %v2250 = vadd.f32 %v2098, %v2249
    %v2251 = vand.u32 %v1052, 4294901760
    %2252 = vmatmul.f32.gmra.mxu0 %v2251
    %v2253 = vpop.f32.mrf.mxu0
    %v2254 = vadd.f32 %v2102, %v2253
    %v2255 = vand.u32 %v1055, 4294901760
    %2256 = vmatmul.f32.gmra.mxu0 %v2255
    %v2257 = vpop.f32.mrf.mxu0
    %v2258 = vadd.f32 %v2106, %v2257
    %v2259 = vand.u32 %v1058, 4294901760
    %2260 = vmatmul.f32.gmra.mxu0 %v2259
    %v2261 = vpop.f32.mrf.mxu0
    %v2262 = vadd.f32 %v2110, %v2261
    %v2263 = vand.u32 %v1061, 4294901760
    %2264 = vmatmul.f32.gmra.mxu0 %v2263
    %v2265 = vpop.f32.mrf.mxu0
    %v2266 = vadd.f32 %v2114, %v2265
    %v2267 = vand.u32 %v1064, 4294901760
    %2268 = vmatmul.f32.gmra.mxu0 %v2267
    %v2269 = vpop.f32.mrf.mxu0
    %v2270 = vadd.f32 %v2118, %v2269
    %v2271 = vand.u32 %v1067, 4294901760
    %2272 = vmatmul.f32.gmra.mxu0 %v2271
    %v2273 = vpop.f32.mrf.mxu0
    %v2274 = vadd.f32 %v2122, %v2273
    %v2275 = vand.u32 %v1070, 4294901760
    %2276 = vmatmul.f32.gmra.mxu0 %v2275
    %v2277 = vpop.f32.mrf.mxu0
    %v2278 = vadd.f32 %v2126, %v2277
    %v2279 = vand.u32 %v1073, 4294901760
    %2280 = vmatmul.f32.gmra.mxu0 %v2279
    %v2281 = vpop.f32.mrf.mxu0
    %v2282 = vadd.f32 %v2130, %v2281
    %v2283 = vand.u32 %v1076, 4294901760
    %2284 = vmatmul.f32.gmra.mxu0 %v2283
    %v2285 = vpop.f32.mrf.mxu0
    %v2286 = vadd.f32 %v2134, %v2285
    %v2287 = vand.u32 %v1079, 4294901760
    %2288 = vmatmul.f32.gmra.mxu0 %v2287
    %v2289 = vpop.f32.mrf.mxu0
    %v2290 = vadd.f32 %v2138, %v2289
    %v2291 = vand.u32 %v1082, 4294901760
    %2292 = vmatmul.f32.gmra.mxu0 %v2291
    %v2293 = vpop.f32.mrf.mxu0
    %v2294 = vadd.f32 %v2142, %v2293
    %v2295 = vand.u32 %v1085, 4294901760
    %2296 = vmatmul.f32.gmra.mxu0 %v2295
    %v2297 = vpop.f32.mrf.mxu0
    %v2298 = vadd.f32 %v2146, %v2297
    %v2299 = vand.u32 %v1088, 4294901760
    %2300 = vmatmul.f32.gmra.mxu0 %v2299
    %v2301 = vpop.f32.mrf.mxu0
    %v2302 = vadd.f32 %v2150, %v2301
    %v2303 = vand.u32 %v1091, 4294901760
    %2304 = vmatmul.f32.gmra.mxu0 %v2303
    %v2305 = vpop.f32.mrf.mxu0
    %v2306 = vadd.f32 %v2154, %v2305
    %v2307 = vand.u32 %v1094, 4294901760
    %2308 = vmatmul.f32.gmra.mxu0 %v2307
    %v2309 = vpop.f32.mrf.mxu0
    %v2310 = vadd.f32 %v2158, %v2309
    %v2311 = vand.u32 %v1097, 4294901760
    %2312 = vmatmul.f32.gmra.mxu0 %v2311
    %v2313 = vpop.f32.mrf.mxu0
    %v2314 = vadd.f32 %v2162, %v2313
    %v2315 = vand.u32 %v1100, 4294901760
    %2316 = vmatmul.f32.gmra.mxu0 %v2315
    %v2317 = vpop.f32.mrf.mxu0
    %v2318 = vadd.f32 %v2166, %v2317
    %v2319 = vand.u32 %v1103, 4294901760
    %2320 = vmatmul.f32.gmra.mxu0 %v2319
    %v2321 = vpop.f32.mrf.mxu0
    %v2322 = vadd.f32 %v2170, %v2321
    %v2323 = vand.u32 %v1106, 4294901760
    %2324 = vmatmul.f32.gmra.mxu0 %v2323
    %v2325 = vpop.f32.mrf.mxu0
    %v2326 = vadd.f32 %v2174, %v2325
    %v2327 = vand.u32 %v1109, 4294901760
    %2328 = vmatmul.f32.gmra.mxu0 %v2327
    %v2329 = vpop.f32.mrf.mxu0
    %v2330 = vadd.f32 %v2178, %v2329
    %v2331 = vand.u32 %v1112, 4294901760
    %2332 = vmatmul.f32.gmra.mxu0 %v2331
    %v2333 = vpop.f32.mrf.mxu0
    %v2334 = vadd.f32 %v2182, %v2333
    %v2335 = vand.u32 %v1115, 4294901760
    %2336 = vmatmul.f32.gmra.mxu0 %v2335
    %v2337 = vpop.f32.mrf.mxu0
    %v2338 = vadd.f32 %v2186, %v2337
    %v2339 = vand.u32 %v1118, 4294901760
    %2340 = vmatmul.f32.gmra.mxu0 %v2339
    %v2341 = vpop.f32.mrf.mxu0
    %v2342 = vadd.f32 %v2190, %v2341
    %v2343 = vand.u32 %v1121, 4294901760
    %2344 = vmatmul.f32.gmra.mxu0 %v2343
    %v2345 = vpop.f32.mrf.mxu0
    %v2346 = vadd.f32 %v2194, %v2345
    %v2347 = vand.u32 %v1124, 4294901760
    %2348 = vmatmul.f32.gmra.mxu0 %v2347
    %v2349 = vpop.f32.mrf.mxu0
    %v2350 = vadd.f32 %v2198, %v2349
    %v2351 = vand.u32 %v1127, 4294901760
    %2352 = vmatmul.f32.gmra.mxu0 %v2351
    %v2353 = vpop.f32.mrf.mxu0
    %v2354 = vadd.f32 %v2202, %v2353
    %2355 = vdwg.mxu0
    %v2356 = vmax.f32 %v2238, 0.0
    %v2357 = vmax.f32 %v2242, 0.0
    %v2358 = vmax.f32 %v2246, 0.0
    %v2359 = vmax.f32 %v2250, 0.0
    %v2360 = vmax.f32 %v2254, 0.0
    %v2361 = vmax.f32 %v2258, 0.0
    %v2362 = vmax.f32 %v2262, 0.0
    %v2363 = vmax.f32 %v2266, 0.0
    %v2364 = vmax.f32 %v2270, 0.0
    %v2365 = vmax.f32 %v2274, 0.0
    %v2366 = vmax.f32 %v2278, 0.0
    %v2367 = vmax.f32 %v2282, 0.0
    %v2368 = vmax.f32 %v2286, 0.0
    %v2369 = vmax.f32 %v2290, 0.0
    %v2370 = vmax.f32 %v2294, 0.0
    %v2371 = vmax.f32 %v2298, 0.0
    %v2372 = vmax.f32 %v2302, 0.0
    %v2373 = vmax.f32 %v2306, 0.0
    %v2374 = vmax.f32 %v2310, 0.0
    %v2375 = vmax.f32 %v2314, 0.0
    %v2376 = vmax.f32 %v2318, 0.0
    %v2377 = vmax.f32 %v2322, 0.0
    %v2378 = vmax.f32 %v2326, 0.0
    %v2379 = vmax.f32 %v2330, 0.0
    %v2380 = vmax.f32 %v2334, 0.0
    %v2381 = vmax.f32 %v2338, 0.0
    %v2382 = vmax.f32 %v2342, 0.0
    %v2383 = vmax.f32 %v2346, 0.0
    %v2384 = vmax.f32 %v2350, 0.0
    %v2385 = vmax.f32 %v2354, 0.0
    %v2386 = vmax.f32 %v2356, %v2371
    %v2387 = vmax.f32 %v2357, %v2372
    %v2388 = vmax.f32 %v2358, %v2373
    %v2389 = vmax.f32 %v2359, %v2374
    %v2390 = vmax.f32 %v2360, %v2375
    %v2391 = vmax.f32 %v2361, %v2376
    %v2392 = vmax.f32 %v2362, %v2377
    %v2393 = vmax.f32 %v2363, %v2378
    %v2394 = vmax.f32 %v2364, %v2379
    %v2395 = vmax.f32 %v2365, %v2380
    %v2396 = vmax.f32 %v2366, %v2381
    %v2397 = vmax.f32 %v2367, %v2382
    %v2398 = vmax.f32 %v2368, %v2383
    %v2399 = vmax.f32 %v2369, %v2384
    %v2400 = vmax.f32 %v2370, %v2385
    %2401 = vst [vmem:[#allocation2] sm:$0xff] %v2386
    %2402 = vst [vmem:[#allocation2 + $0x8] sm:$0xff] %v2387
    %2403 = vst [vmem:[#allocation2 + $0x10] sm:$0xff] %v2388
    %2404 = vst [vmem:[#allocation2 + $0x18] sm:$0xff] %v2389
    %2405 = vst [vmem:[#allocation2 + $0x20] sm:$0xff] %v2390
    %2406 = vst [vmem:[#allocation2 + $0x28] sm:$0xff] %v2391
    %2407 = vst [vmem:[#allocation2 + $0x30] sm:$0xff] %v2392
    %2408 = vst [vmem:[#allocation2 + $0x38] sm:$0xff] %v2393
    %2409 = vst [vmem:[#allocation2 + $0x40] sm:$0xff] %v2394
    %2410 = vst [vmem:[#allocation2 + $0x48] sm:$0xff] %v2395
    %2411 = vst [vmem:[#allocation2 + $0x50] sm:$0xff] %v2396
    %2412 = vst [vmem:[#allocation2 + $0x58] sm:$0xff] %v2397
    %2413 = vst [vmem:[#allocation2 + $0x60] sm:$0xff] %v2398
    %2414 = vst [vmem:[#allocation2 + $0x68] sm:$0xff] %v2399
    %2415 = vst [vmem:[#allocation2 + $0x70] sm:$0xff] %v2400
    // Predicated region
    $region22: #{tpu_custom_call.1} parent=1 // pred_check
      _
    $region23: #{tpu_custom_call.1} parent=1 // pred_check_branch
      %2417 = sbr.rel (0) target = $region25
    $region24: #{tpu_custom_call.1} parent=1 // pred_region
      %2419 = vsyncadd [#allocation3], 0
      %s2420 = sshll.u32 [#allocation2], 4
      %s2421 = int_to_ptr.vmem [resolvable:$true] %s2420
      %s2422 = sshll.u32 %s5, 4
      %s2423 = int_to_ptr.hbm [resolvable:$true] %s2422
      %2428 = dma.vmem_to_hbm [thread:$0]  %s2421, 1920, %s2423, [#allocation3], 128, 128, 8
    $region25: #{tpu_custom_call.1} parent=1 // pred_fallthru
      _
    // Predicated region
    $region26: #{tpu_custom_call.1} parent=1 // pred_check
      _
    $region27: #{tpu_custom_call.1} parent=1 // pred_check_branch
      %2430 = sbr.rel (0) target = $region29
    $region28: #{tpu_custom_call.1} parent=1 // pred_region
      %2432 = dma.done [#allocation3], 1920
    $region29: #{tpu_custom_call.1} parent=1 // pred_fallthru
      _
    %2433 = vsyncpa [#allocation3], 1

</llo_original>
